<compile_context>
chip_gen: v7x
topology: tpu7x:2x2x1
jax: 0.10.0
libtpu: 0.0.40
codegen_flags: <defaults>
</compile_context>

<pallas_src>
import functools

import jax
import jax.numpy as jnp
from jax import lax
from jax.experimental import pallas as pl
from jax.experimental.pallas import tpu as pltpu


def _dwconv_kernel(x_ref, w_ref, b_ref, o_ref, *, H, W):
    # x_ref: (N, TC)  flattened row-major (H, W) plane, one batch / channel tile
    # w_ref: (9, TC)  depthwise taps, row-major over (kh, kw)
    # b_ref: (1, TC)  bias
    # o_ref: (N, TC)
    f32 = jnp.float32
    N = H * W

    x = x_ref[...].astype(f32)        # (N, TC)
    w = w_ref[...].astype(f32)        # (9, TC)
    bias = b_ref[...].astype(f32)     # (1, TC), broadcasts over N

    # Border masks for the zero halo (one iota + a few VPU compares, whole plane).
    flat = lax.broadcasted_iota(jnp.int32, x.shape, 0)
    col = lax.rem(flat, W)
    not_top = flat >= W               # x[h-1, w] exists
    not_bot = flat < (N - W)          # x[h+1, w] exists
    not_first_col = col > 0           # x[h, w-1] exists
    not_last_col = col < (W - 1)      # x[h, w+1] exists

    # H neighbours: circular roll on the flattened axis (XLU), zero the wrapped rows.
    row_t = jnp.where(not_top, pltpu.roll(x, W, 0), 0.0)        # x[h-1, w]
    row_b = jnp.where(not_bot, pltpu.roll(x, N - W, 0), 0.0)    # x[h+1, w]

    # Collapse the kh sum first; group terms by which kw offset they feed.
    a_left = row_t * w[0] + x * w[3] + row_b * w[6]     # multiplies x[., w-1]
    a_center = row_t * w[1] + x * w[4] + row_b * w[7]   # multiplies x[., w]
    a_right = row_t * w[2] + x * w[5] + row_b * w[8]    # multiplies x[., w+1]

    # W neighbours: roll by +/-1 on the same flattened axis, zero the wrapped columns.
    left = jnp.where(not_first_col, pltpu.roll(a_left, 1, 0), 0.0)
    right = jnp.where(not_last_col, pltpu.roll(a_right, N - 1, 0), 0.0)

    o_ref[...] = (left + a_center + right + bias).astype(o_ref.dtype)


def _pick_channel_tile(C, N, itemsize, budget_bytes=16 * 1024 * 1024):
    """Largest multiple-of-128 channel tile dividing C whose working set fits the budget."""
    if C % 128 != 0:
        # TODO(synk): for C not a multiple of 128, fold (W, C) -> W*C onto the lane dim for
        # full lane utilization; the full-C block below is correct, just not lane-dense.
        return C
    for cand in (1024, 768, 512, 384, 256, 128):
        if C % cand == 0:
            blk = N * cand
            # 2x double-buffered in+out blocks (native dtype) + ~8 live f32 temporaries.
            if 4 * blk * itemsize + 8 * blk * 4 <= budget_bytes:
                return cand
    return 128


def dwconv_pallas(x, weight, bias, H, W, *, channel_tile=None):
    """x: (B, N, C), weight: (3, 3, C), bias: (C,). Returns (B, N, C)."""
    B, N, C = x.shape
    assert N == H * W
    itemsize = jnp.dtype(x.dtype).itemsize

    w_flat = weight.reshape(9, C)
    b_2d = bias.reshape(1, C)

    TC = channel_tile if channel_tile is not None else _pick_channel_tile(C, N, itemsize)
    assert C % TC == 0

    # TODO(synk): add H/W spatial tiling (manual-DMA halo) for very large images; currently
    # the full H*W plane of one channel tile is resident per grid step.
    block_bytes = N * TC * itemsize
    vmem_limit = int(min(100 * 1024 * 1024,
                         max(32 * 1024 * 1024, 4 * block_bytes + 10 * N * TC * 4)))

    kernel = functools.partial(_dwconv_kernel, H=H, W=W)

    return pl.pallas_call(
        kernel,
        out_shape=jax.ShapeDtypeStruct((B, N, C), x.dtype),
        grid_spec=pltpu.PrefetchScalarGridSpec(
            num_scalar_prefetch=0,
            grid=(B, C // TC),
            in_specs=[
                pl.BlockSpec((None, N, TC), lambda b, c: (b, 0, c)),
                pl.BlockSpec((9, TC), lambda b, c: (0, c)),
                pl.BlockSpec((1, TC), lambda b, c: (0, c)),
            ],
            out_specs=pl.BlockSpec((None, N, TC), lambda b, c: (b, 0, c)),
        ),
        compiler_params=pltpu.CompilerParams(
            dimension_semantics=("parallel", "parallel"),
            vmem_limit_bytes=vmem_limit,
        ),
    )(x, w_flat, b_2d)


def dwconv_reference(x, weight, bias, H, W):
    """Pure-JAX reference (lax depthwise conv) matching PyTorch semantics."""
    B, N, C = x.shape
    x_img = x.reshape(B, H, W, C)
    k = weight.reshape(3, 3, 1, C)   # HWIO, feature_group_count = C
    y = lax.conv_general_dilated(
        x_img, k,
        window_strides=(1, 1),
        padding=((1, 1), (1, 1)),
        dimension_numbers=("NHWC", "HWIO", "NHWC"),
        feature_group_count=C,
    )
    y = y + bias.reshape(1, 1, 1, C)
    return y.reshape(B, N, C)


def _make_inputs(key, B, C, H, W, dtype=jnp.float32):
    kx, kw, kb = jax.random.split(key, 3)
    x = jax.random.normal(kx, (B, H * W, C), dtype=dtype)
    # Conv2d(dim, dim, 3, groups=dim) -> weight (dim, 1, 3, 3); stored here as (3, 3, C).
    fan_in = 9.0  # in_channels/groups * kH * kW = 1 * 3 * 3
    bound = 1.0 / (fan_in ** 0.5)
    weight = jax.random.uniform(kw, (3, 3, C), dtype, -bound, bound)
    bias = jax.random.uniform(kb, (C,), dtype, -bound, bound)
    return x, weight, bias


if __name__ == "__main__":
    key = jax.random.PRNGKey(0)
    k0, k1 = jax.random.split(key, 2)

    # Main case: B=2, C=256, 16x16 image.
    B, C, Hh, Ww = 2, 256, 16, 16
    x, weight, bias = _make_inputs(k0, B, C, Hh, Ww)
    ref = dwconv_reference(x, weight, bias, Hh, Ww)

    out = jax.block_until_ready(dwconv_pallas(x, weight, bias, Hh, Ww))
    assert out.shape == (B, Hh * Ww, C)
    assert jnp.allclose(out, ref, atol=1e-5, rtol=1e-5), "mismatch vs reference (auto tile)"

    # Forced 128-wide channel tiling (exercises the (B, C//TC) grid / index_map path).
    out_t = jax.block_until_ready(dwconv_pallas(x, weight, bias, Hh, Ww, channel_tile=128))
    assert jnp.allclose(out_t, ref, atol=1e-5, rtol=1e-5), "mismatch vs reference (C-tiled)"

    # Non-power-of-two W (exercises the remainder-based column masks / roll shifts).
    B2, C2, H2, W2 = 1, 128, 8, 24
    x2, w2, b2 = _make_inputs(k1, B2, C2, H2, W2)
    ref2 = dwconv_reference(x2, w2, b2, H2, W2)
    out2 = jax.block_until_ready(dwconv_pallas(x2, w2, b2, H2, W2))
    assert jnp.allclose(out2, ref2, atol=1e-5, rtol=1e-5), "mismatch vs reference (W=24)"

    print("KERNEL_OK")
</pallas_src>

<mosaic_0001>
module attributes {stable_mosaic.version = 11 : i64} {
  func.func @_dwconv_kernel(%arg0: i32, %arg1: i32, %arg2: memref<1x256x256xf32, #tpu.memory_space<vmem>>, %arg3: memref<9x256xf32, #tpu.memory_space<vmem>>, %arg4: memref<1x256xf32, #tpu.memory_space<vmem>>, %arg5: memref<1x256x256xf32, #tpu.memory_space<vmem>>) attributes {dimension_semantics = [#tpu.dimension_semantics<parallel>, #tpu.dimension_semantics<parallel>], iteration_bounds = array<i64: 2, 1>, scalar_prefetch = 0 : i64, scratch_operands = 0 : i64, tpu.core_type = #tpu.core_type<tc>, window_params = [{transform_indices = @transform_0, window_bounds = array<i64: 1, 256, 256>}, {transform_indices = @transform_1, window_bounds = array<i64: 9, 256>}, {transform_indices = @transform_2, window_bounds = array<i64: 1, 256>}, {transform_indices = @transform_3, window_bounds = array<i64: 1, 256, 256>}]} {
    %c0 = arith.constant 0 : index
    %c0_0 = arith.constant 0 : index
    %c0_1 = arith.constant 0 : index
    %0 = vector.load %arg2[%c0, %c0_0, %c0_1] : memref<1x256x256xf32, #tpu.memory_space<vmem>>, vector<1x256x256xf32>
    %1 = vector.shape_cast %0 : vector<1x256x256xf32> to vector<256x256xf32>
    %c0_2 = arith.constant 0 : index
    %c0_3 = arith.constant 0 : index
    %2 = vector.load %arg3[%c0_2, %c0_3] : memref<9x256xf32, #tpu.memory_space<vmem>>, vector<9x256xf32>
    %c0_4 = arith.constant 0 : index
    %c0_5 = arith.constant 0 : index
    %3 = vector.load %arg4[%c0_4, %c0_5] : memref<1x256xf32, #tpu.memory_space<vmem>>, vector<1x256xf32>
    %4 = tpu.iota {dimensions = array<i32: 0>} : vector<256x256xi32>
    %c16_i32 = arith.constant 16 : i32
    %5 = vector.broadcast %c16_i32 : i32 to vector<256x256xi32>
    %6 = arith.remsi %4, %5 : vector<256x256xi32>
    %c16_i32_6 = arith.constant 16 : i32
    %7 = vector.broadcast %c16_i32_6 : i32 to vector<256x256xi32>
    %8 = arith.cmpi sge, %4, %7 : vector<256x256xi32>
    %c240_i32 = arith.constant 240 : i32
    %9 = vector.broadcast %c240_i32 : i32 to vector<256x256xi32>
    %10 = arith.cmpi slt, %4, %9 : vector<256x256xi32>
    %c0_i32 = arith.constant 0 : i32
    %11 = vector.broadcast %c0_i32 : i32 to vector<256x256xi32>
    %12 = arith.cmpi sgt, %6, %11 : vector<256x256xi32>
    %c15_i32 = arith.constant 15 : i32
    %13 = vector.broadcast %c15_i32 : i32 to vector<256x256xi32>
    %14 = arith.cmpi slt, %6, %13 : vector<256x256xi32>
    %c16_i32_7 = arith.constant 16 : i32
    %15 = tpu.dynamic_rotate %1 by %c16_i32_7 dim 0 : vector<256x256xf32>, i32 -> vector<256x256xf32>
    %cst = arith.constant 0.000000e+00 : f32
    %16 = vector.broadcast %cst : f32 to vector<256x256xf32>
    %17 = arith.select %8, %15, %16 : vector<256x256xi1>, vector<256x256xf32>
    %c240_i32_8 = arith.constant 240 : i32
    %18 = tpu.dynamic_rotate %1 by %c240_i32_8 dim 0 : vector<256x256xf32>, i32 -> vector<256x256xf32>
    %cst_9 = arith.constant 0.000000e+00 : f32
    %19 = vector.broadcast %cst_9 : f32 to vector<256x256xf32>
    %20 = arith.select %10, %18, %19 : vector<256x256xi1>, vector<256x256xf32>
    %21 = vector.extract_strided_slice %2 {offsets = [0, 0], sizes = [1, 256], strides = [1, 1]} : vector<9x256xf32> to vector<1x256xf32>
    %22 = vector.shape_cast %21 : vector<1x256xf32> to vector<256xf32>
    %23 = vector.shape_cast %22 : vector<256xf32> to vector<1x256xf32>
    %24 = vector.broadcast %23 : vector<1x256xf32> to vector<256x256xf32>
    %25 = arith.mulf %17, %24 : vector<256x256xf32>
    %26 = vector.extract_strided_slice %2 {offsets = [3, 0], sizes = [1, 256], strides = [1, 1]} : vector<9x256xf32> to vector<1x256xf32>
    %27 = vector.shape_cast %26 : vector<1x256xf32> to vector<256xf32>
    %28 = vector.shape_cast %27 : vector<256xf32> to vector<1x256xf32>
    %29 = vector.broadcast %28 : vector<1x256xf32> to vector<256x256xf32>
    %30 = arith.mulf %1, %29 : vector<256x256xf32>
    %31 = arith.addf %25, %30 : vector<256x256xf32>
    %32 = vector.extract_strided_slice %2 {offsets = [6, 0], sizes = [1, 256], strides = [1, 1]} : vector<9x256xf32> to vector<1x256xf32>
    %33 = vector.shape_cast %32 : vector<1x256xf32> to vector<256xf32>
    %34 = vector.shape_cast %33 : vector<256xf32> to vector<1x256xf32>
    %35 = vector.broadcast %34 : vector<1x256xf32> to vector<256x256xf32>
    %36 = arith.mulf %20, %35 : vector<256x256xf32>
    %37 = arith.addf %31, %36 : vector<256x256xf32>
    %38 = vector.extract_strided_slice %2 {offsets = [1, 0], sizes = [1, 256], strides = [1, 1]} : vector<9x256xf32> to vector<1x256xf32>
    %39 = vector.shape_cast %38 : vector<1x256xf32> to vector<256xf32>
    %40 = vector.shape_cast %39 : vector<256xf32> to vector<1x256xf32>
    %41 = vector.broadcast %40 : vector<1x256xf32> to vector<256x256xf32>
    %42 = arith.mulf %17, %41 : vector<256x256xf32>
    %43 = vector.extract_strided_slice %2 {offsets = [4, 0], sizes = [1, 256], strides = [1, 1]} : vector<9x256xf32> to vector<1x256xf32>
    %44 = vector.shape_cast %43 : vector<1x256xf32> to vector<256xf32>
    %45 = vector.shape_cast %44 : vector<256xf32> to vector<1x256xf32>
    %46 = vector.broadcast %45 : vector<1x256xf32> to vector<256x256xf32>
    %47 = arith.mulf %1, %46 : vector<256x256xf32>
    %48 = arith.addf %42, %47 : vector<256x256xf32>
    %49 = vector.extract_strided_slice %2 {offsets = [7, 0], sizes = [1, 256], strides = [1, 1]} : vector<9x256xf32> to vector<1x256xf32>
    %50 = vector.shape_cast %49 : vector<1x256xf32> to vector<256xf32>
    %51 = vector.shape_cast %50 : vector<256xf32> to vector<1x256xf32>
    %52 = vector.broadcast %51 : vector<1x256xf32> to vector<256x256xf32>
    %53 = arith.mulf %20, %52 : vector<256x256xf32>
    %54 = arith.addf %48, %53 : vector<256x256xf32>
    %55 = vector.extract_strided_slice %2 {offsets = [2, 0], sizes = [1, 256], strides = [1, 1]} : vector<9x256xf32> to vector<1x256xf32>
    %56 = vector.shape_cast %55 : vector<1x256xf32> to vector<256xf32>
    %57 = vector.shape_cast %56 : vector<256xf32> to vector<1x256xf32>
    %58 = vector.broadcast %57 : vector<1x256xf32> to vector<256x256xf32>
    %59 = arith.mulf %17, %58 : vector<256x256xf32>
    %60 = vector.extract_strided_slice %2 {offsets = [5, 0], sizes = [1, 256], strides = [1, 1]} : vector<9x256xf32> to vector<1x256xf32>
    %61 = vector.shape_cast %60 : vector<1x256xf32> to vector<256xf32>
    %62 = vector.shape_cast %61 : vector<256xf32> to vector<1x256xf32>
    %63 = vector.broadcast %62 : vector<1x256xf32> to vector<256x256xf32>
    %64 = arith.mulf %1, %63 : vector<256x256xf32>
    %65 = arith.addf %59, %64 : vector<256x256xf32>
    %66 = vector.extract_strided_slice %2 {offsets = [8, 0], sizes = [1, 256], strides = [1, 1]} : vector<9x256xf32> to vector<1x256xf32>
    %67 = vector.shape_cast %66 : vector<1x256xf32> to vector<256xf32>
    %68 = vector.shape_cast %67 : vector<256xf32> to vector<1x256xf32>
    %69 = vector.broadcast %68 : vector<1x256xf32> to vector<256x256xf32>
    %70 = arith.mulf %20, %69 : vector<256x256xf32>
    %71 = arith.addf %65, %70 : vector<256x256xf32>
    %c1_i32 = arith.constant 1 : i32
    %72 = tpu.dynamic_rotate %37 by %c1_i32 dim 0 : vector<256x256xf32>, i32 -> vector<256x256xf32>
    %cst_10 = arith.constant 0.000000e+00 : f32
    %73 = vector.broadcast %cst_10 : f32 to vector<256x256xf32>
    %74 = arith.select %12, %72, %73 : vector<256x256xi1>, vector<256x256xf32>
    %c255_i32 = arith.constant 255 : i32
    %75 = tpu.dynamic_rotate %71 by %c255_i32 dim 0 : vector<256x256xf32>, i32 -> vector<256x256xf32>
    %cst_11 = arith.constant 0.000000e+00 : f32
    %76 = vector.broadcast %cst_11 : f32 to vector<256x256xf32>
    %77 = arith.select %14, %75, %76 : vector<256x256xi1>, vector<256x256xf32>
    %78 = arith.addf %74, %54 : vector<256x256xf32>
    %79 = arith.addf %78, %77 : vector<256x256xf32>
    %80 = vector.broadcast %3 : vector<1x256xf32> to vector<256x256xf32>
    %81 = arith.addf %79, %80 : vector<256x256xf32>
    %c0_12 = arith.constant 0 : index
    %c0_13 = arith.constant 0 : index
    %c0_14 = arith.constant 0 : index
    %82 = vector.load %arg5[%c0_12, %c0_13, %c0_14] : memref<1x256x256xf32, #tpu.memory_space<vmem>>, vector<1x256x256xf32>
    %83 = vector.shape_cast %82 : vector<1x256x256xf32> to vector<256x256xf32>
    %84 = vector.shape_cast %81 : vector<256x256xf32> to vector<1x256x256xf32>
    tpu.vector_store %arg5[%c0_12, %c0_13, %c0_14], %84 {strides = array<i32>} : memref<1x256x256xf32, #tpu.memory_space<vmem>>, vector<1x256x256xf32>,
    return
  }
  func.func @transform_0(%arg0: i32, %arg1: i32) -> (i32, i32, i32) {
    %c0_i32 = arith.constant 0 : i32
    %c0_i32_0 = arith.constant 0 : i32
    return %arg0, %c0_i32, %arg1 : i32, i32, i32
  }
  func.func @transform_1(%arg0: i32, %arg1: i32) -> (i32, i32) {
    %c0_i32 = arith.constant 0 : i32
    %c0_i32_0 = arith.constant 0 : i32
    return %c0_i32, %arg1 : i32, i32
  }
  func.func @transform_2(%arg0: i32, %arg1: i32) -> (i32, i32) {
    %c0_i32 = arith.constant 0 : i32
    %c0_i32_0 = arith.constant 0 : i32
    return %c0_i32, %arg1 : i32, i32
  }
  func.func @transform_3(%arg0: i32, %arg1: i32) -> (i32, i32, i32) {
    %c0_i32 = arith.constant 0 : i32
    %c0_i32_0 = arith.constant 0 : i32
    return %arg0, %c0_i32, %arg1 : i32, i32, i32
  }
}

</mosaic_0001>

<llo_original>
// kernel: tpu_custom_call.1
$region0: #{tpu_custom_call.1}
  #allocation0 [shape = 'u32[]', space=smem, size = 0x4, offset = 0x4, fixed_abs, tag = 'smem constant byte address 0x4 - core index']
  #allocation1 [shape = 'u32[144,128]{1,0:T(1,128)}', space=vmem, size = 0x12000, scoped, tag = 'internal scratch']
  %s0 = inlined_call_operand.hbm [shape: f32[2,256,256], index: 0, kind: input, shape index: {}]
  %s1 = inlined_call_operand.hbm [shape: f32[9,256], index: 1, kind: input, shape index: {}]
  %s2 = inlined_call_operand.vmem [shape: f32[1,256], index: 2, kind: input, shape index: {}]
  %s3 = inlined_call_operand.hbm [shape: f32[2,256,256], index: 3, kind: output, shape index: {}]
  %s4 = sld [smem:[#allocation0]]
  $region53: #{tpu_custom_call.1} parent=0
    _
  %s6 = ssub.s32 1, %s4
  %s7 = scalar_select 0, %s6, %s4
  $region1: #{tpu_custom_call.1} parent=0
    #allocation2 [shape = 'u8[524288]{0}', space=vmem, size = 0x80000, scoped, tag = 'input window, operand 0']
    #allocation3 [shape = 's32[2]{0}', space=sflag, size = 0x8, scoped, tag = 'scoped memory for tpu_custom_call.1']
    #allocation4 [shape = 's32[2]{0}', space=sflag, size = 0x8, scoped, tag = 'scoped memory for tpu_custom_call.1']
    #allocation5 [shape = 'u8[16384]{0}', space=vmem, size = 0x4000, scoped, tag = 'input window, operand 1, single buffered']
    #allocation6 [shape = 's32[1]{0}', space=sflag, size = 0x4, scoped, tag = 'scoped memory for tpu_custom_call.1']
    #allocation7 [shape = 'u8[524288]{0}', space=vmem, size = 0x80000, scoped, tag = 'output window, operand 0']
    %8 = vsyncpa [#allocation3], 0
    %s9 = scalar_lea.sflag [#allocation3], 1
    %10 = vsyncpa %s9, 0
    %11 = vsyncpa [#allocation6], 0
    %12 = vsyncpa [#allocation4], 0
    %s13 = scalar_lea.sflag [#allocation4], 1
    %14 = vsyncpa %s13, 0
    loop: start=0, step=1, limit=4
    $region2: #{tpu_custom_call.1} parent=1 // loop_pre_header
      _
    $region3: #{tpu_custom_call.1} parent=1 // loop_header
      %s16 = sphi 0, %s20
      %p17 = scmp.ge.s32.totalorder %s16, 4
      %s23 = sphi 0, %s35
      %s24 = sphi 0, %s31
      %s25 = sphi 0, %s23
      %s26 = sphi 0, %s24
      %s27 = sphi 0, %s25
      %s28 = sphi 0, %s26
      %s40 = sphi 0, %s42
      %s43 = sphi 0, %s40
      %s44 = sphi 0, %s43
      %s60 = sphi 0, %s44
      %s66 = sphi 0, %s68
      %s69 = sphi 0, %s66
      %s70 = sphi 0, %s69
      %s86 = sphi 0, %s70
      %s92 = sphi 0, %s94
      %s95 = sphi 0, %s92
      %s96 = sphi 0, %s95
      %s112 = sphi 0, %s96
      %s120 = sphi 0, %s122
      %s123 = sphi 0, %s120
      %s124 = sphi 0, %s123
      %s140 = sphi 0, %s124
    $region4: #{tpu_custom_call.1} parent=1 // loop_header_branch
      %19 = sbr.rel (%p17) target = $region8
    $region5: #{tpu_custom_call.1} parent=1 // loop_body
      %s21 = ssub.s32 %s16, 1
      %s22 = ssub.s32 %s16, 2
      %s29 = sadd.s32 1, %s24
      %p30 = scmp.ge.s32.totalorder %s29, 1
      %s31 = scalar_select %p30, 0, %s29
      %s32 = sadd.s32 1, %s23
      %s33 = scalar_select %p30, %s32, %s23
      %p34 = scmp.ge.s32.totalorder %s33, 2
      %s35 = scalar_select %p34, 0, %s33
      %s36 = ssub.s32 %s23, %s35
      %s37 = ssub.s32 %s24, %s31
      %s38 = sor.u32 %s36, %s37
      %p39 = scmp.eq.s32.totalorder %s38, 0
      %s41 = sadd.s32 %s40, 1
      %s42 = scalar_select %p39, %s40, %s41
      %p45 = pneg %p39
      %p46 = scmp.eq.s32.totalorder %s16, 1
      %p47 = por %p45, %p46
      %p48 = scmp.ne.s32.totalorder %s40, %s43
      %p49 = scmp.eq.s32.totalorder %s16, 0
      %p50 = por %p48, %p49
      %p51 = scmp.ne.s32.totalorder %s40, %s43
      %p52 = scmp.eq.s32.totalorder %s21, 1
      %p53 = por %p51, %p52
      %p54 = scmp.ne.s32.totalorder %s43, %s44
      %p55 = scmp.eq.s32.totalorder %s21, 0
      %p56 = por %p54, %p55
      %p57 = scmp.ne.s32.totalorder %s43, %s44
      %p58 = scmp.eq.s32.totalorder %s22, 1
      %p59 = por %p57, %p58
      %p61 = scmp.ne.s32.totalorder %s44, %s60
      %p62 = scmp.eq.s32.totalorder %s22, 0
      %p63 = por %p61, %p62
      %s64 = ssub.s32 %s24, %s31
      %p65 = scmp.eq.s32.totalorder %s64, 0
      %s67 = sadd.s32 %s66, 1
      %s68 = scalar_select %p65, %s66, %s67
      %p71 = pneg %p65
      %p72 = scmp.eq.s32.totalorder %s16, 1
      %p73 = por %p71, %p72
      %p74 = scmp.ne.s32.totalorder %s66, %s69
      %p75 = scmp.eq.s32.totalorder %s16, 0
      %p76 = por %p74, %p75
      %p77 = scmp.ne.s32.totalorder %s66, %s69
      %p78 = scmp.eq.s32.totalorder %s21, 1
      %p79 = por %p77, %p78
      %p80 = scmp.ne.s32.totalorder %s69, %s70
      %p81 = scmp.eq.s32.totalorder %s21, 0
      %p82 = por %p80, %p81
      %p83 = scmp.ne.s32.totalorder %s69, %s70
      %p84 = scmp.eq.s32.totalorder %s22, 1
      %p85 = por %p83, %p84
      %p87 = scmp.ne.s32.totalorder %s70, %s86
      %p88 = scmp.eq.s32.totalorder %s22, 0
      %p89 = por %p87, %p88
      %s90 = ssub.s32 %s24, %s31
      %p91 = scmp.eq.s32.totalorder %s90, 0
      %s93 = sadd.s32 %s92, 1
      %s94 = scalar_select %p91, %s92, %s93
      %p97 = pneg %p91
      %p98 = scmp.eq.s32.totalorder %s16, 1
      %p99 = por %p97, %p98
      %p100 = scmp.ne.s32.totalorder %s92, %s95
      %p101 = scmp.eq.s32.totalorder %s16, 0
      %p102 = por %p100, %p101
      %p103 = scmp.ne.s32.totalorder %s92, %s95
      %p104 = scmp.eq.s32.totalorder %s21, 1
      %p105 = por %p103, %p104
      %p106 = scmp.ne.s32.totalorder %s95, %s96
      %p107 = scmp.eq.s32.totalorder %s21, 0
      %p108 = por %p106, %p107
      %p109 = scmp.ne.s32.totalorder %s95, %s96
      %p110 = scmp.eq.s32.totalorder %s22, 1
      %p111 = por %p109, %p110
      %p113 = scmp.ne.s32.totalorder %s96, %s112
      %p114 = scmp.eq.s32.totalorder %s22, 0
      %p115 = por %p113, %p114
      %s116 = ssub.s32 %s23, %s35
      %s117 = ssub.s32 %s24, %s31
      %s118 = sor.u32 %s116, %s117
      %p119 = scmp.eq.s32.totalorder %s118, 0
      %s121 = sadd.s32 %s120, 1
      %s122 = scalar_select %p119, %s120, %s121
      %p125 = pneg %p119
      %p126 = scmp.eq.s32.totalorder %s16, 1
      %p127 = por %p125, %p126
      %p128 = scmp.ne.s32.totalorder %s120, %s123
      %p129 = scmp.eq.s32.totalorder %s16, 0
      %p130 = por %p128, %p129
      %p131 = scmp.ne.s32.totalorder %s120, %s123
      %p132 = scmp.eq.s32.totalorder %s21, 1
      %p133 = por %p131, %p132
      %p134 = scmp.ne.s32.totalorder %s123, %s124
      %p135 = scmp.eq.s32.totalorder %s21, 0
      %p136 = por %p134, %p135
      %p137 = scmp.ne.s32.totalorder %s123, %s124
      %p138 = scmp.eq.s32.totalorder %s22, 1
      %p139 = por %p137, %p138
      %p141 = scmp.ne.s32.totalorder %s124, %s140
      %p142 = scmp.eq.s32.totalorder %s22, 0
      %p143 = por %p141, %p142
      %p144 = scmp.le.s32.totalorder 1, %s16
      %p145 = scmp.lt.s32.totalorder %s16, 3
      %p146 = pnand %p144, %p145
      %p147 = pneg %p146
      // Predicated region
      $region9: #{tpu_custom_call.1} parent=5 // pred_check
        _
      $region10: #{tpu_custom_call.1} parent=5 // pred_check_branch
        %149 = sbr.rel (%p146) target = $region12
      $region11: #{tpu_custom_call.1} parent=5 // pred_region
        %s150 = ssub.s32 %s16, 1
        // Predicated region
        $region13: #{tpu_custom_call.1} parent=11 // pred_check
          %p151 = pneg %p82
        $region14: #{tpu_custom_call.1} parent=11 // pred_check_branch
          %153 = sbr.rel (%p151) target = $region16
        $region15: #{tpu_custom_call.1} parent=11 // pred_region
          %s154 = smul.u32 2, %s26
          %s156 = ssub.s32 512, 512
          %157 = vsyncadd [#allocation6], %s156
          %s158 = smul.addr %s154, 128
          %s159 = scalar_lea.hbm %s1, %s158
          %s160 = sshll.u32 [#allocation5], 4
          %s161 = int_to_ptr.vmem [resolvable:$true] %s160
          %166 = dma.hbm_to_vmem [thread:$0]  %s159, 512, %s161, [#allocation6], 256, 256, 16
        $region16: #{tpu_custom_call.1} parent=11 // pred_fallthru
          _
        // Predicated region
        $region17: #{tpu_custom_call.1} parent=11 // pred_check
          %p167 = pneg %p108
        $region18: #{tpu_custom_call.1} parent=11 // pred_check_branch
          %169 = sbr.rel (%p167) target = $region20
        $region19: #{tpu_custom_call.1} parent=11 // pred_region
          %s170 = smul.u32 2, %s26
          %p171 = scmp.lt.s32.totalorder %s170, 1
          %s172 = scalar_select %p171, %s170, 1
          %s173 = scalar_lea.vmem %s2, %s172
          %s174 = smul.u32 2, %s26
        $region20: #{tpu_custom_call.1} parent=11 // pred_fallthru
          _
      $region12: #{tpu_custom_call.1} parent=5 // pred_fallthru
        _
      %p175 = scmp.lt.s32.totalorder %s16, 2
      // Predicated region
      $region21: #{tpu_custom_call.1} parent=5 // pred_check
        %p176 = pneg %p175
      $region22: #{tpu_custom_call.1} parent=5 // pred_check_branch
        %178 = sbr.rel (%p176) target = $region24
      $region23: #{tpu_custom_call.1} parent=5 // pred_region
        // Predicated region
        $region25: #{tpu_custom_call.1} parent=23 // pred_check
          %p179 = pneg %p50
        $region26: #{tpu_custom_call.1} parent=23 // pred_check_branch
          %181 = sbr.rel (%p179) target = $region28
        $region27: #{tpu_custom_call.1} parent=23 // pred_region
          %s182 = sand.u32 %s40, 1
          %s183 = scalar_lea.sflag [#allocation3], %s182
          %s184 = sand.u32 %s40, 1
          %s185 = smul.addr %s184, 512
          %s186 = scalar_lea.vmem [#allocation2], %s185
          %s187 = smul.u32 2, %s24
          %s189 = ssub.s32 8192, 8192
          %190 = vsyncadd %s183, %s189
          %s191 = smul.addr %s23, 64
          %s192 = sadd.s32 %s187, %s191
          %s193 = smul.addr %s192, 128
          %s194 = scalar_lea.hbm %s0, %s193
          %s195 = sshll.u32 %s186, 4
          %s196 = int_to_ptr.vmem [resolvable:$true] %s195
          %201 = dma.hbm_to_vmem [thread:$0]  %s194, 8192, %s196, %s183, 256, 256, 16
        $region28: #{tpu_custom_call.1} parent=23 // pred_fallthru
          _
      $region24: #{tpu_custom_call.1} parent=5 // pred_fallthru
        _
      %p202 = scmp.le.s32.totalorder 1, %s16
      %p203 = scmp.lt.s32.totalorder %s16, 3
      %p204 = pnand %p202, %p203
      %p205 = pneg %p204
      // Predicated region
      $region29: #{tpu_custom_call.1} parent=5 // pred_check
        _
      $region30: #{tpu_custom_call.1} parent=5 // pred_check_branch
        %207 = sbr.rel (%p204) target = $region32
      $region31: #{tpu_custom_call.1} parent=5 // pred_region
        %s208 = ssub.s32 %s16, 1
        %s209 = sand.u32 %s43, 1
        %s210 = scalar_lea.sflag [#allocation3], %s209
        %s211 = sand.u32 %s43, 1
        %s212 = smul.addr %s211, 512
        %s213 = scalar_lea.vmem [#allocation2], %s212
        // Predicated region
        $region33: #{tpu_custom_call.1} parent=31 // pred_check
          %p214 = pneg %p56
        $region34: #{tpu_custom_call.1} parent=31 // pred_check_branch
          %216 = sbr.rel (%p214) target = $region36
        $region35: #{tpu_custom_call.1} parent=31 // pred_region
          %217 = dma.done %s210, 8192
        $region36: #{tpu_custom_call.1} parent=31 // pred_fallthru
          _
        // Predicated region
        $region37: #{tpu_custom_call.1} parent=31 // pred_check
          %p218 = pneg %p82
        $region38: #{tpu_custom_call.1} parent=31 // pred_check_branch
          %220 = sbr.rel (%p218) target = $region40
        $region39: #{tpu_custom_call.1} parent=31 // pred_region
          %221 = dma.done [#allocation6], 512
        $region40: #{tpu_custom_call.1} parent=31 // pred_fallthru
          _
        %s222 = sand.u32 %s43, 1
        %s223 = scalar_lea.sflag [#allocation3], %s222
        %s224 = sand.u32 %s43, 1
        %s225 = smul.addr %s224, 512
        %s226 = scalar_lea.vmem [#allocation2], %s225
        %p227 = pneg %p56
        %p228 = pneg %p53
        %p229 = pneg %p82
        %p230 = pneg %p79
        %s231 = smul.u32 2, %s26
        %p232 = scmp.lt.s32.totalorder %s231, 1
        %s233 = scalar_select %p232, %s231, 1
        %s234 = scalar_lea.vmem %s2, %s233
        %p235 = pneg %p108
        %p236 = pneg %p105
        %p237 = pneg %p136
        %p238 = pneg %p133
        %s239 = sand.u32 %s123, 1
        %s240 = scalar_lea.sflag [#allocation4], %s239
        %s241 = sand.u32 %s123, 1
        %s242 = smul.addr %s241, 512
        %s243 = scalar_lea.vmem [#allocation7], %s242
        %s244 = smul.u32 2, %s26
        %s245 = smul.u32 2, %s26
        %s246 = smul.u32 2, %s26
        %p247 = scmp.lt.s32.totalorder %s246, 1
        %s248 = scalar_select %p247, %s246, 1
        %s249 = scalar_lea.vmem %s2, %s248
        %s250 = smul.u32 2, %s26
        %s251 = smul.u32 2, %s26
        %v252 = vld [vmem:[%s213] sm:$0xff]
        %v253 = vld [vmem:[%s213 + $0x8] sm:$0xff]
        %v254 = vld [vmem:[%s213 + $0x10] sm:$0xff]
        %v255 = vld [vmem:[%s213 + $0x18] sm:$0xff]
        %v256 = vld [vmem:[%s213 + $0x20] sm:$0xff]
        %v257 = vld [vmem:[%s213 + $0x28] sm:$0xff]
        %v258 = vld [vmem:[%s213 + $0x30] sm:$0xff]
        %v259 = vld [vmem:[%s213 + $0x38] sm:$0xff]
        %v260 = vld [vmem:[%s213 + $0x40] sm:$0xff]
        %v261 = vld [vmem:[%s213 + $0x48] sm:$0xff]
        %v262 = vld [vmem:[%s213 + $0x50] sm:$0xff]
        %v263 = vld [vmem:[%s213 + $0x58] sm:$0xff]
        %v264 = vld [vmem:[%s213 + $0x60] sm:$0xff]
        %v265 = vld [vmem:[%s213 + $0x68] sm:$0xff]
        %v266 = vld [vmem:[%s213 + $0x70] sm:$0xff]
        %v267 = vld [vmem:[%s213 + $0x78] sm:$0xff]
        %v268 = vld [vmem:[%s213 + $0x80] sm:$0xff]
        %v269 = vld [vmem:[%s213 + $0x88] sm:$0xff]
        %v270 = vld [vmem:[%s213 + $0x90] sm:$0xff]
        %v271 = vld [vmem:[%s213 + $0x98] sm:$0xff]
        %v272 = vld [vmem:[%s213 + $0xa0] sm:$0xff]
        %v273 = vld [vmem:[%s213 + $0xa8] sm:$0xff]
        %v274 = vld [vmem:[%s213 + $0xb0] sm:$0xff]
        %v275 = vld [vmem:[%s213 + $0xb8] sm:$0xff]
        %v276 = vld [vmem:[%s213 + $0xc0] sm:$0xff]
        %v277 = vld [vmem:[%s213 + $0xc8] sm:$0xff]
        %v278 = vld [vmem:[%s213 + $0xd0] sm:$0xff]
        %v279 = vld [vmem:[%s213 + $0xd8] sm:$0xff]
        %v280 = vld [vmem:[%s213 + $0xe0] sm:$0xff]
        %v281 = vld [vmem:[%s213 + $0xe8] sm:$0xff]
        %v282 = vld [vmem:[%s213 + $0xf0] sm:$0xff]
        %v283 = vld [vmem:[%s213 + $0xf8] sm:$0xff]
        %v284 = vld [vmem:[%s213 + $0x100] sm:$0xff]
        %v285 = vld [vmem:[%s213 + $0x108] sm:$0xff]
        %v286 = vld [vmem:[%s213 + $0x110] sm:$0xff]
        %v287 = vld [vmem:[%s213 + $0x118] sm:$0xff]
        %v288 = vld [vmem:[%s213 + $0x120] sm:$0xff]
        %v289 = vld [vmem:[%s213 + $0x128] sm:$0xff]
        %v290 = vld [vmem:[%s213 + $0x130] sm:$0xff]
        %v291 = vld [vmem:[%s213 + $0x138] sm:$0xff]
        %v292 = vld [vmem:[%s213 + $0x140] sm:$0xff]
        %v293 = vld [vmem:[%s213 + $0x148] sm:$0xff]
        %v294 = vld [vmem:[%s213 + $0x150] sm:$0xff]
        %v295 = vld [vmem:[%s213 + $0x158] sm:$0xff]
        %v296 = vld [vmem:[%s213 + $0x160] sm:$0xff]
        %v297 = vld [vmem:[%s213 + $0x168] sm:$0xff]
        %v298 = vld [vmem:[%s213 + $0x170] sm:$0xff]
        %v299 = vld [vmem:[%s213 + $0x178] sm:$0xff]
        %v300 = vld [vmem:[%s213 + $0x180] sm:$0xff]
        %v301 = vld [vmem:[%s213 + $0x188] sm:$0xff]
        %v302 = vld [vmem:[%s213 + $0x190] sm:$0xff]
        %v303 = vld [vmem:[%s213 + $0x198] sm:$0xff]
        %v304 = vld [vmem:[%s213 + $0x1a0] sm:$0xff]
        %v305 = vld [vmem:[%s213 + $0x1a8] sm:$0xff]
        %v306 = vld [vmem:[%s213 + $0x1b0] sm:$0xff]
        %v307 = vld [vmem:[%s213 + $0x1b8] sm:$0xff]
        %v308 = vld [vmem:[%s213 + $0x1c0] sm:$0xff]
        %v309 = vld [vmem:[%s213 + $0x1c8] sm:$0xff]
        %v310 = vld [vmem:[%s213 + $0x1d0] sm:$0xff]
        %v311 = vld [vmem:[%s213 + $0x1d8] sm:$0xff]
        %v312 = vld [vmem:[%s213 + $0x1e0] sm:$0xff]
        %v313 = vld [vmem:[%s213 + $0x1e8] sm:$0xff]
        %v314 = vld [vmem:[%s213 + $0x1f0] sm:$0xff]
        %v315 = vld [vmem:[%s213 + $0x1f8] sm:$0xff]
        %v316 = vld [vmem:[#allocation5] sm:$0xff]
        %v317 = vld [vmem:[#allocation5 + $0x8] sm:$0xff]
        %v318 = vld [vmem:[#allocation5 + $0x10] sm:$0x1]
        %v319 = vld [vmem:[#allocation5 + $0x18] sm:$0x1]
        %v320 = vld [vmem:[%s249] sm:$0x3]
        %v321 = vlaneseq
        %v322 = vshrl.u32 %v321, 7
        %v323 = vadd.s32 %v322, 8
        %v324 = vadd.s32 %v322, 16
        %v325 = vadd.s32 %v322, 24
        %v326 = vadd.s32 %v322, 32
        %v327 = vadd.s32 %v322, 40
        %v328 = vadd.s32 %v322, 48
        %v329 = vadd.s32 %v322, 56
        %v330 = vadd.s32 %v322, 64
        %v331 = vadd.s32 %v322, 72
        %v332 = vadd.s32 %v322, 80
        %v333 = vadd.s32 %v322, 88
        %v334 = vadd.s32 %v322, 96
        %v335 = vadd.s32 %v322, 104
        %v336 = vadd.s32 %v322, 112
        %v337 = vadd.s32 %v322, 120
        %v338 = vadd.s32 %v322, 128
        %v339 = vadd.s32 %v322, 136
        %v340 = vadd.s32 %v322, 144
        %v341 = vadd.s32 %v322, 152
        %v342 = vadd.s32 %v322, 160
        %v343 = vadd.s32 %v322, 168
        %v344 = vadd.s32 %v322, 176
        %v345 = vadd.s32 %v322, 184
        %v346 = vadd.s32 %v322, 192
        %v347 = vadd.s32 %v322, 200
        %v348 = vadd.s32 %v322, 208
        %v349 = vadd.s32 %v322, 216
        %v350 = vadd.s32 %v322, 224
        %v351 = vadd.s32 %v322, 232
        %v352 = vadd.s32 %v322, 240
        %v353 = vadd.s32 %v322, 248
        %vm354 = vcmp.lt.s32.totalorder %v322, 0
        %v355 = vsub.s32 0, %v322
        %v356 = vsel %vm354, %v355, %v322
        %v357 = vshrl.u32 %v356, 4
        %v358 = vand.u32 %v356, 15
        %v359 = vsub.s32 0, %v358
        %v360 = vsel %vm354, %v359, %v358
        %vm361 = vcmp.lt.s32.totalorder %v323, 0
        %v362 = vsub.s32 0, %v323
        %v363 = vsel %vm361, %v362, %v323
        %v364 = vshrl.u32 %v363, 4
        %v365 = vand.u32 %v363, 15
        %v366 = vsub.s32 0, %v365
        %v367 = vsel %vm361, %v366, %v365
        %vm368 = vcmp.lt.s32.totalorder %v324, 0
        %v369 = vsub.s32 0, %v324
        %v370 = vsel %vm368, %v369, %v324
        %v371 = vshrl.u32 %v370, 4
        %v372 = vand.u32 %v370, 15
        %v373 = vsub.s32 0, %v372
        %v374 = vsel %vm368, %v373, %v372
        %vm375 = vcmp.lt.s32.totalorder %v325, 0
        %v376 = vsub.s32 0, %v325
        %v377 = vsel %vm375, %v376, %v325
        %v378 = vshrl.u32 %v377, 4
        %v379 = vand.u32 %v377, 15
        %v380 = vsub.s32 0, %v379
        %v381 = vsel %vm375, %v380, %v379
        %vm382 = vcmp.lt.s32.totalorder %v326, 0
        %v383 = vsub.s32 0, %v326
        %v384 = vsel %vm382, %v383, %v326
        %v385 = vshrl.u32 %v384, 4
        %v386 = vand.u32 %v384, 15
        %v387 = vsub.s32 0, %v386
        %v388 = vsel %vm382, %v387, %v386
        %vm389 = vcmp.lt.s32.totalorder %v327, 0
        %v390 = vsub.s32 0, %v327
        %v391 = vsel %vm389, %v390, %v327
        %v392 = vshrl.u32 %v391, 4
        %v393 = vand.u32 %v391, 15
        %v394 = vsub.s32 0, %v393
        %v395 = vsel %vm389, %v394, %v393
        %vm396 = vcmp.lt.s32.totalorder %v328, 0
        %v397 = vsub.s32 0, %v328
        %v398 = vsel %vm396, %v397, %v328
        %v399 = vshrl.u32 %v398, 4
        %v400 = vand.u32 %v398, 15
        %v401 = vsub.s32 0, %v400
        %v402 = vsel %vm396, %v401, %v400
        %vm403 = vcmp.lt.s32.totalorder %v329, 0
        %v404 = vsub.s32 0, %v329
        %v405 = vsel %vm403, %v404, %v329
        %v406 = vshrl.u32 %v405, 4
        %v407 = vand.u32 %v405, 15
        %v408 = vsub.s32 0, %v407
        %v409 = vsel %vm403, %v408, %v407
        %vm410 = vcmp.lt.s32.totalorder %v330, 0
        %v411 = vsub.s32 0, %v330
        %v412 = vsel %vm410, %v411, %v330
        %v413 = vshrl.u32 %v412, 4
        %v414 = vand.u32 %v412, 15
        %v415 = vsub.s32 0, %v414
        %v416 = vsel %vm410, %v415, %v414
        %vm417 = vcmp.lt.s32.totalorder %v331, 0
        %v418 = vsub.s32 0, %v331
        %v419 = vsel %vm417, %v418, %v331
        %v420 = vshrl.u32 %v419, 4
        %v421 = vand.u32 %v419, 15
        %v422 = vsub.s32 0, %v421
        %v423 = vsel %vm417, %v422, %v421
        %vm424 = vcmp.lt.s32.totalorder %v332, 0
        %v425 = vsub.s32 0, %v332
        %v426 = vsel %vm424, %v425, %v332
        %v427 = vshrl.u32 %v426, 4
        %v428 = vand.u32 %v426, 15
        %v429 = vsub.s32 0, %v428
        %v430 = vsel %vm424, %v429, %v428
        %vm431 = vcmp.lt.s32.totalorder %v333, 0
        %v432 = vsub.s32 0, %v333
        %v433 = vsel %vm431, %v432, %v333
        %v434 = vshrl.u32 %v433, 4
        %v435 = vand.u32 %v433, 15
        %v436 = vsub.s32 0, %v435
        %v437 = vsel %vm431, %v436, %v435
        %vm438 = vcmp.lt.s32.totalorder %v334, 0
        %v439 = vsub.s32 0, %v334
        %v440 = vsel %vm438, %v439, %v334
        %v441 = vshrl.u32 %v440, 4
        %v442 = vand.u32 %v440, 15
        %v443 = vsub.s32 0, %v442
        %v444 = vsel %vm438, %v443, %v442
        %vm445 = vcmp.lt.s32.totalorder %v335, 0
        %v446 = vsub.s32 0, %v335
        %v447 = vsel %vm445, %v446, %v335
        %v448 = vshrl.u32 %v447, 4
        %v449 = vand.u32 %v447, 15
        %v450 = vsub.s32 0, %v449
        %v451 = vsel %vm445, %v450, %v449
        %vm452 = vcmp.lt.s32.totalorder %v336, 0
        %v453 = vsub.s32 0, %v336
        %v454 = vsel %vm452, %v453, %v336
        %v455 = vshrl.u32 %v454, 4
        %v456 = vand.u32 %v454, 15
        %v457 = vsub.s32 0, %v456
        %v458 = vsel %vm452, %v457, %v456
        %vm459 = vcmp.lt.s32.totalorder %v337, 0
        %v460 = vsub.s32 0, %v337
        %v461 = vsel %vm459, %v460, %v337
        %v462 = vshrl.u32 %v461, 4
        %v463 = vand.u32 %v461, 15
        %v464 = vsub.s32 0, %v463
        %v465 = vsel %vm459, %v464, %v463
        %vm466 = vcmp.lt.s32.totalorder %v338, 0
        %v467 = vsub.s32 0, %v338
        %v468 = vsel %vm466, %v467, %v338
        %v469 = vshrl.u32 %v468, 4
        %v470 = vand.u32 %v468, 15
        %v471 = vsub.s32 0, %v470
        %v472 = vsel %vm466, %v471, %v470
        %vm473 = vcmp.lt.s32.totalorder %v339, 0
        %v474 = vsub.s32 0, %v339
        %v475 = vsel %vm473, %v474, %v339
        %v476 = vshrl.u32 %v475, 4
        %v477 = vand.u32 %v475, 15
        %v478 = vsub.s32 0, %v477
        %v479 = vsel %vm473, %v478, %v477
        %vm480 = vcmp.lt.s32.totalorder %v340, 0
        %v481 = vsub.s32 0, %v340
        %v482 = vsel %vm480, %v481, %v340
        %v483 = vshrl.u32 %v482, 4
        %v484 = vand.u32 %v482, 15
        %v485 = vsub.s32 0, %v484
        %v486 = vsel %vm480, %v485, %v484
        %vm487 = vcmp.lt.s32.totalorder %v341, 0
        %v488 = vsub.s32 0, %v341
        %v489 = vsel %vm487, %v488, %v341
        %v490 = vshrl.u32 %v489, 4
        %v491 = vand.u32 %v489, 15
        %v492 = vsub.s32 0, %v491
        %v493 = vsel %vm487, %v492, %v491
        %vm494 = vcmp.lt.s32.totalorder %v342, 0
        %v495 = vsub.s32 0, %v342
        %v496 = vsel %vm494, %v495, %v342
        %v497 = vshrl.u32 %v496, 4
        %v498 = vand.u32 %v496, 15
        %v499 = vsub.s32 0, %v498
        %v500 = vsel %vm494, %v499, %v498
        %vm501 = vcmp.lt.s32.totalorder %v343, 0
        %v502 = vsub.s32 0, %v343
        %v503 = vsel %vm501, %v502, %v343
        %v504 = vshrl.u32 %v503, 4
        %v505 = vand.u32 %v503, 15
        %v506 = vsub.s32 0, %v505
        %v507 = vsel %vm501, %v506, %v505
        %vm508 = vcmp.lt.s32.totalorder %v344, 0
        %v509 = vsub.s32 0, %v344
        %v510 = vsel %vm508, %v509, %v344
        %v511 = vshrl.u32 %v510, 4
        %v512 = vand.u32 %v510, 15
        %v513 = vsub.s32 0, %v512
        %v514 = vsel %vm508, %v513, %v512
        %vm515 = vcmp.lt.s32.totalorder %v345, 0
        %v516 = vsub.s32 0, %v345
        %v517 = vsel %vm515, %v516, %v345
        %v518 = vshrl.u32 %v517, 4
        %v519 = vand.u32 %v517, 15
        %v520 = vsub.s32 0, %v519
        %v521 = vsel %vm515, %v520, %v519
        %vm522 = vcmp.lt.s32.totalorder %v346, 0
        %v523 = vsub.s32 0, %v346
        %v524 = vsel %vm522, %v523, %v346
        %v525 = vshrl.u32 %v524, 4
        %v526 = vand.u32 %v524, 15
        %v527 = vsub.s32 0, %v526
        %v528 = vsel %vm522, %v527, %v526
        %vm529 = vcmp.lt.s32.totalorder %v347, 0
        %v530 = vsub.s32 0, %v347
        %v531 = vsel %vm529, %v530, %v347
        %v532 = vshrl.u32 %v531, 4
        %v533 = vand.u32 %v531, 15
        %v534 = vsub.s32 0, %v533
        %v535 = vsel %vm529, %v534, %v533
        %vm536 = vcmp.lt.s32.totalorder %v348, 0
        %v537 = vsub.s32 0, %v348
        %v538 = vsel %vm536, %v537, %v348
        %v539 = vshrl.u32 %v538, 4
        %v540 = vand.u32 %v538, 15
        %v541 = vsub.s32 0, %v540
        %v542 = vsel %vm536, %v541, %v540
        %vm543 = vcmp.lt.s32.totalorder %v349, 0
        %v544 = vsub.s32 0, %v349
        %v545 = vsel %vm543, %v544, %v349
        %v546 = vshrl.u32 %v545, 4
        %v547 = vand.u32 %v545, 15
        %v548 = vsub.s32 0, %v547
        %v549 = vsel %vm543, %v548, %v547
        %vm550 = vcmp.lt.s32.totalorder %v350, 0
        %v551 = vsub.s32 0, %v350
        %v552 = vsel %vm550, %v551, %v350
        %v553 = vshrl.u32 %v552, 4
        %v554 = vand.u32 %v552, 15
        %v555 = vsub.s32 0, %v554
        %v556 = vsel %vm550, %v555, %v554
        %vm557 = vcmp.lt.s32.totalorder %v351, 0
        %v558 = vsub.s32 0, %v351
        %v559 = vsel %vm557, %v558, %v351
        %v560 = vshrl.u32 %v559, 4
        %v561 = vand.u32 %v559, 15
        %v562 = vsub.s32 0, %v561
        %v563 = vsel %vm557, %v562, %v561
        %vm564 = vcmp.lt.s32.totalorder %v352, 0
        %v565 = vsub.s32 0, %v352
        %v566 = vsel %vm564, %v565, %v352
        %v567 = vshrl.u32 %v566, 4
        %v568 = vand.u32 %v566, 15
        %v569 = vsub.s32 0, %v568
        %v570 = vsel %vm564, %v569, %v568
        %vm571 = vcmp.lt.s32.totalorder %v353, 0
        %v572 = vsub.s32 0, %v353
        %v573 = vsel %vm571, %v572, %v353
        %v574 = vshrl.u32 %v573, 4
        %v575 = vand.u32 %v573, 15
        %v576 = vsub.s32 0, %v575
        %v577 = vsel %vm571, %v576, %v575
        %vm578 = vcmp.ge.s32.totalorder %v322, 16
        %vm579 = vcmp.ge.s32.totalorder %v323, 16
        %vm580 = vcmp.ge.s32.totalorder %v324, 16
        %vm581 = vcmp.ge.s32.totalorder %v325, 16
        %vm582 = vcmp.ge.s32.totalorder %v326, 16
        %vm583 = vcmp.ge.s32.totalorder %v327, 16
        %vm584 = vcmp.ge.s32.totalorder %v328, 16
        %vm585 = vcmp.ge.s32.totalorder %v329, 16
        %vm586 = vcmp.ge.s32.totalorder %v330, 16
        %vm587 = vcmp.ge.s32.totalorder %v331, 16
        %vm588 = vcmp.ge.s32.totalorder %v332, 16
        %vm589 = vcmp.ge.s32.totalorder %v333, 16
        %vm590 = vcmp.ge.s32.totalorder %v334, 16
        %vm591 = vcmp.ge.s32.totalorder %v335, 16
        %vm592 = vcmp.ge.s32.totalorder %v336, 16
        %vm593 = vcmp.ge.s32.totalorder %v337, 16
        %vm594 = vcmp.ge.s32.totalorder %v338, 16
        %vm595 = vcmp.ge.s32.totalorder %v339, 16
        %vm596 = vcmp.ge.s32.totalorder %v340, 16
        %vm597 = vcmp.ge.s32.totalorder %v341, 16
        %vm598 = vcmp.ge.s32.totalorder %v342, 16
        %vm599 = vcmp.ge.s32.totalorder %v343, 16
        %vm600 = vcmp.ge.s32.totalorder %v344, 16
        %vm601 = vcmp.ge.s32.totalorder %v345, 16
        %vm602 = vcmp.ge.s32.totalorder %v346, 16
        %vm603 = vcmp.ge.s32.totalorder %v347, 16
        %vm604 = vcmp.ge.s32.totalorder %v348, 16
        %vm605 = vcmp.ge.s32.totalorder %v349, 16
        %vm606 = vcmp.ge.s32.totalorder %v350, 16
        %vm607 = vcmp.ge.s32.totalorder %v351, 16
        %vm608 = vcmp.ge.s32.totalorder %v352, 16
        %vm609 = vcmp.ge.s32.totalorder %v353, 16
        %vm610 = vcmp.lt.s32.totalorder %v322, 240
        %vm611 = vcmp.lt.s32.totalorder %v323, 240
        %vm612 = vcmp.lt.s32.totalorder %v324, 240
        %vm613 = vcmp.lt.s32.totalorder %v325, 240
        %vm614 = vcmp.lt.s32.totalorder %v326, 240
        %vm615 = vcmp.lt.s32.totalorder %v327, 240
        %vm616 = vcmp.lt.s32.totalorder %v328, 240
        %vm617 = vcmp.lt.s32.totalorder %v329, 240
        %vm618 = vcmp.lt.s32.totalorder %v330, 240
        %vm619 = vcmp.lt.s32.totalorder %v331, 240
        %vm620 = vcmp.lt.s32.totalorder %v332, 240
        %vm621 = vcmp.lt.s32.totalorder %v333, 240
        %vm622 = vcmp.lt.s32.totalorder %v334, 240
        %vm623 = vcmp.lt.s32.totalorder %v335, 240
        %vm624 = vcmp.lt.s32.totalorder %v336, 240
        %vm625 = vcmp.lt.s32.totalorder %v337, 240
        %vm626 = vcmp.lt.s32.totalorder %v338, 240
        %vm627 = vcmp.lt.s32.totalorder %v339, 240
        %vm628 = vcmp.lt.s32.totalorder %v340, 240
        %vm629 = vcmp.lt.s32.totalorder %v341, 240
        %vm630 = vcmp.lt.s32.totalorder %v342, 240
        %vm631 = vcmp.lt.s32.totalorder %v343, 240
        %vm632 = vcmp.lt.s32.totalorder %v344, 240
        %vm633 = vcmp.lt.s32.totalorder %v345, 240
        %vm634 = vcmp.lt.s32.totalorder %v346, 240
        %vm635 = vcmp.lt.s32.totalorder %v347, 240
        %vm636 = vcmp.lt.s32.totalorder %v348, 240
        %vm637 = vcmp.lt.s32.totalorder %v349, 240
        %vm638 = vcmp.lt.s32.totalorder %v350, 240
        %vm639 = vcmp.lt.s32.totalorder %v351, 240
        %vm640 = vcmp.lt.s32.totalorder %v352, 240
        %vm641 = vcmp.lt.s32.totalorder %v353, 240
        %vm642 = vcmp.gt.s32.totalorder %v360, 0
        %vm643 = vcmp.gt.s32.totalorder %v367, 0
        %vm644 = vcmp.gt.s32.totalorder %v374, 0
        %vm645 = vcmp.gt.s32.totalorder %v381, 0
        %vm646 = vcmp.gt.s32.totalorder %v388, 0
        %vm647 = vcmp.gt.s32.totalorder %v395, 0
        %vm648 = vcmp.gt.s32.totalorder %v402, 0
        %vm649 = vcmp.gt.s32.totalorder %v409, 0
        %vm650 = vcmp.gt.s32.totalorder %v416, 0
        %vm651 = vcmp.gt.s32.totalorder %v423, 0
        %vm652 = vcmp.gt.s32.totalorder %v430, 0
        %vm653 = vcmp.gt.s32.totalorder %v437, 0
        %vm654 = vcmp.gt.s32.totalorder %v444, 0
        %vm655 = vcmp.gt.s32.totalorder %v451, 0
        %vm656 = vcmp.gt.s32.totalorder %v458, 0
        %vm657 = vcmp.gt.s32.totalorder %v465, 0
        %vm658 = vcmp.gt.s32.totalorder %v472, 0
        %vm659 = vcmp.gt.s32.totalorder %v479, 0
        %vm660 = vcmp.gt.s32.totalorder %v486, 0
        %vm661 = vcmp.gt.s32.totalorder %v493, 0
        %vm662 = vcmp.gt.s32.totalorder %v500, 0
        %vm663 = vcmp.gt.s32.totalorder %v507, 0
        %vm664 = vcmp.gt.s32.totalorder %v514, 0
        %vm665 = vcmp.gt.s32.totalorder %v521, 0
        %vm666 = vcmp.gt.s32.totalorder %v528, 0
        %vm667 = vcmp.gt.s32.totalorder %v535, 0
        %vm668 = vcmp.gt.s32.totalorder %v542, 0
        %vm669 = vcmp.gt.s32.totalorder %v549, 0
        %vm670 = vcmp.gt.s32.totalorder %v556, 0
        %vm671 = vcmp.gt.s32.totalorder %v563, 0
        %vm672 = vcmp.gt.s32.totalorder %v570, 0
        %vm673 = vcmp.gt.s32.totalorder %v577, 0
        %vm674 = vcmp.lt.s32.totalorder %v360, 15
        %vm675 = vcmp.lt.s32.totalorder %v367, 15
        %vm676 = vcmp.lt.s32.totalorder %v374, 15
        %vm677 = vcmp.lt.s32.totalorder %v381, 15
        %vm678 = vcmp.lt.s32.totalorder %v388, 15
        %vm679 = vcmp.lt.s32.totalorder %v395, 15
        %vm680 = vcmp.lt.s32.totalorder %v402, 15
        %vm681 = vcmp.lt.s32.totalorder %v409, 15
        %vm682 = vcmp.lt.s32.totalorder %v416, 15
        %vm683 = vcmp.lt.s32.totalorder %v423, 15
        %vm684 = vcmp.lt.s32.totalorder %v430, 15
        %vm685 = vcmp.lt.s32.totalorder %v437, 15
        %vm686 = vcmp.lt.s32.totalorder %v444, 15
        %vm687 = vcmp.lt.s32.totalorder %v451, 15
        %vm688 = vcmp.lt.s32.totalorder %v458, 15
        %vm689 = vcmp.lt.s32.totalorder %v465, 15
        %vm690 = vcmp.lt.s32.totalorder %v472, 15
        %vm691 = vcmp.lt.s32.totalorder %v479, 15
        %vm692 = vcmp.lt.s32.totalorder %v486, 15
        %vm693 = vcmp.lt.s32.totalorder %v493, 15
        %vm694 = vcmp.lt.s32.totalorder %v500, 15
        %vm695 = vcmp.lt.s32.totalorder %v507, 15
        %vm696 = vcmp.lt.s32.totalorder %v514, 15
        %vm697 = vcmp.lt.s32.totalorder %v521, 15
        %vm698 = vcmp.lt.s32.totalorder %v528, 15
        %vm699 = vcmp.lt.s32.totalorder %v535, 15
        %vm700 = vcmp.lt.s32.totalorder %v542, 15
        %vm701 = vcmp.lt.s32.totalorder %v549, 15
        %vm702 = vcmp.lt.s32.totalorder %v556, 15
        %vm703 = vcmp.lt.s32.totalorder %v563, 15
        %vm704 = vcmp.lt.s32.totalorder %v570, 15
        %vm705 = vcmp.lt.s32.totalorder %v577, 15
        %v706 = vsel %vm578, %v312, 0.0
        %v707 = vsel %vm578, %v313, 0.0
        %v708 = vsel %vm579, %v314, 0.0
        %v709 = vsel %vm579, %v315, 0.0
        %v710 = vsel %vm580, %v252, 0.0
        %v711 = vsel %vm580, %v253, 0.0
        %v712 = vsel %vm581, %v254, 0.0
        %v713 = vsel %vm581, %v255, 0.0
        %v714 = vsel %vm582, %v256, 0.0
        %v715 = vsel %vm582, %v257, 0.0
        %v716 = vsel %vm583, %v258, 0.0
        %v717 = vsel %vm583, %v259, 0.0
        %v718 = vsel %vm584, %v260, 0.0
        %v719 = vsel %vm584, %v261, 0.0
        %v720 = vsel %vm585, %v262, 0.0
        %v721 = vsel %vm585, %v263, 0.0
        %v722 = vsel %vm586, %v264, 0.0
        %v723 = vsel %vm586, %v265, 0.0
        %v724 = vsel %vm587, %v266, 0.0
        %v725 = vsel %vm587, %v267, 0.0
        %v726 = vsel %vm588, %v268, 0.0
        %v727 = vsel %vm588, %v269, 0.0
        %v728 = vsel %vm589, %v270, 0.0
        %v729 = vsel %vm589, %v271, 0.0
        %v730 = vsel %vm590, %v272, 0.0
        %v731 = vsel %vm590, %v273, 0.0
        %v732 = vsel %vm591, %v274, 0.0
        %v733 = vsel %vm591, %v275, 0.0
        %v734 = vsel %vm592, %v276, 0.0
        %v735 = vsel %vm592, %v277, 0.0
        %v736 = vsel %vm593, %v278, 0.0
        %v737 = vsel %vm593, %v279, 0.0
        %v738 = vsel %vm594, %v280, 0.0
        %v739 = vsel %vm594, %v281, 0.0
        %v740 = vsel %vm595, %v282, 0.0
        %v741 = vsel %vm595, %v283, 0.0
        %v742 = vsel %vm596, %v284, 0.0
        %v743 = vsel %vm596, %v285, 0.0
        %v744 = vsel %vm597, %v286, 0.0
        %v745 = vsel %vm597, %v287, 0.0
        %v746 = vsel %vm598, %v288, 0.0
        %v747 = vsel %vm598, %v289, 0.0
        %v748 = vsel %vm599, %v290, 0.0
        %v749 = vsel %vm599, %v291, 0.0
        %v750 = vsel %vm600, %v292, 0.0
        %v751 = vsel %vm600, %v293, 0.0
        %v752 = vsel %vm601, %v294, 0.0
        %v753 = vsel %vm601, %v295, 0.0
        %v754 = vsel %vm602, %v296, 0.0
        %v755 = vsel %vm602, %v297, 0.0
        %v756 = vsel %vm603, %v298, 0.0
        %v757 = vsel %vm603, %v299, 0.0
        %v758 = vsel %vm604, %v300, 0.0
        %v759 = vsel %vm604, %v301, 0.0
        %v760 = vsel %vm605, %v302, 0.0
        %v761 = vsel %vm605, %v303, 0.0
        %v762 = vsel %vm606, %v304, 0.0
        %v763 = vsel %vm606, %v305, 0.0
        %v764 = vsel %vm607, %v306, 0.0
        %v765 = vsel %vm607, %v307, 0.0
        %v766 = vsel %vm608, %v308, 0.0
        %v767 = vsel %vm608, %v309, 0.0
        %v768 = vsel %vm609, %v310, 0.0
        %v769 = vsel %vm609, %v311, 0.0
        %v770 = vsel %vm610, %v256, 0.0
        %v771 = vsel %vm610, %v257, 0.0
        %v772 = vsel %vm611, %v258, 0.0
        %v773 = vsel %vm611, %v259, 0.0
        %v774 = vsel %vm612, %v260, 0.0
        %v775 = vsel %vm612, %v261, 0.0
        %v776 = vsel %vm613, %v262, 0.0
        %v777 = vsel %vm613, %v263, 0.0
        %v778 = vsel %vm614, %v264, 0.0
        %v779 = vsel %vm614, %v265, 0.0
        %v780 = vsel %vm615, %v266, 0.0
        %v781 = vsel %vm615, %v267, 0.0
        %v782 = vsel %vm616, %v268, 0.0
        %v783 = vsel %vm616, %v269, 0.0
        %v784 = vsel %vm617, %v270, 0.0
        %v785 = vsel %vm617, %v271, 0.0
        %v786 = vsel %vm618, %v272, 0.0
        %v787 = vsel %vm618, %v273, 0.0
        %v788 = vsel %vm619, %v274, 0.0
        %v789 = vsel %vm619, %v275, 0.0
        %v790 = vsel %vm620, %v276, 0.0
        %v791 = vsel %vm620, %v277, 0.0
        %v792 = vsel %vm621, %v278, 0.0
        %v793 = vsel %vm621, %v279, 0.0
        %v794 = vsel %vm622, %v280, 0.0
        %v795 = vsel %vm622, %v281, 0.0
        %v796 = vsel %vm623, %v282, 0.0
        %v797 = vsel %vm623, %v283, 0.0
        %v798 = vsel %vm624, %v284, 0.0
        %v799 = vsel %vm624, %v285, 0.0
        %v800 = vsel %vm625, %v286, 0.0
        %v801 = vsel %vm625, %v287, 0.0
        %v802 = vsel %vm626, %v288, 0.0
        %v803 = vsel %vm626, %v289, 0.0
        %v804 = vsel %vm627, %v290, 0.0
        %v805 = vsel %vm627, %v291, 0.0
        %v806 = vsel %vm628, %v292, 0.0
        %v807 = vsel %vm628, %v293, 0.0
        %v808 = vsel %vm629, %v294, 0.0
        %v809 = vsel %vm629, %v295, 0.0
        %v810 = vsel %vm630, %v296, 0.0
        %v811 = vsel %vm630, %v297, 0.0
        %v812 = vsel %vm631, %v298, 0.0
        %v813 = vsel %vm631, %v299, 0.0
        %v814 = vsel %vm632, %v300, 0.0
        %v815 = vsel %vm632, %v301, 0.0
        %v816 = vsel %vm633, %v302, 0.0
        %v817 = vsel %vm633, %v303, 0.0
        %v818 = vsel %vm634, %v304, 0.0
        %v819 = vsel %vm634, %v305, 0.0
        %v820 = vsel %vm635, %v306, 0.0
        %v821 = vsel %vm635, %v307, 0.0
        %v822 = vsel %vm636, %v308, 0.0
        %v823 = vsel %vm636, %v309, 0.0
        %v824 = vsel %vm637, %v310, 0.0
        %v825 = vsel %vm637, %v311, 0.0
        %v826 = vsel %vm638, %v312, 0.0
        %v827 = vsel %vm638, %v313, 0.0
        %v828 = vsel %vm639, %v314, 0.0
        %v829 = vsel %vm639, %v315, 0.0
        %v830 = vsel %vm640, %v252, 0.0
        %v831 = vsel %vm640, %v253, 0.0
        %v832 = vsel %vm641, %v254, 0.0
        %v833 = vsel %vm641, %v255, 0.0
        %v834 = vlaneseq
        %v835 = vshrl.u32 %v834, 7
        %v836 = vsub.s32 0, %v835
        %v837 = vrot.slane %v316, %v836
        %v838 = vlaneseq
        %v839 = vshrl.u32 %v838, 7
        %v840 = vsub.s32 0, %v839
        %v841 = vrot.slane %v317, %v840
        %v842 = vmul.f32 %v706, %v837
        %v843 = vmul.f32 %v707, %v841
        %v844 = vmul.f32 %v708, %v837
        %v845 = vmul.f32 %v709, %v841
        %v846 = vmul.f32 %v710, %v837
        %v847 = vmul.f32 %v711, %v841
        %v848 = vmul.f32 %v712, %v837
        %v849 = vmul.f32 %v713, %v841
        %v850 = vmul.f32 %v714, %v837
        %v851 = vmul.f32 %v715, %v841
        %v852 = vmul.f32 %v716, %v837
        %v853 = vmul.f32 %v717, %v841
        %v854 = vmul.f32 %v718, %v837
        %v855 = vmul.f32 %v719, %v841
        %v856 = vmul.f32 %v720, %v837
        %v857 = vmul.f32 %v721, %v841
        %v858 = vmul.f32 %v722, %v837
        %v859 = vmul.f32 %v723, %v841
        %v860 = vmul.f32 %v724, %v837
        %v861 = vmul.f32 %v725, %v841
        %v862 = vmul.f32 %v726, %v837
        %v863 = vmul.f32 %v727, %v841
        %v864 = vmul.f32 %v728, %v837
        %v865 = vmul.f32 %v729, %v841
        %v866 = vmul.f32 %v730, %v837
        %v867 = vmul.f32 %v731, %v841
        %v868 = vmul.f32 %v732, %v837
        %v869 = vmul.f32 %v733, %v841
        %v870 = vmul.f32 %v734, %v837
        %v871 = vmul.f32 %v735, %v841
        %v872 = vmul.f32 %v736, %v837
        %v873 = vmul.f32 %v737, %v841
        %v874 = vmul.f32 %v738, %v837
        %v875 = vmul.f32 %v739, %v841
        %v876 = vmul.f32 %v740, %v837
        %v877 = vmul.f32 %v741, %v841
        %v878 = vmul.f32 %v742, %v837
        %v879 = vmul.f32 %v743, %v841
        %v880 = vmul.f32 %v744, %v837
        %v881 = vmul.f32 %v745, %v841
        %v882 = vmul.f32 %v746, %v837
        %v883 = vmul.f32 %v747, %v841
        %v884 = vmul.f32 %v748, %v837
        %v885 = vmul.f32 %v749, %v841
        %v886 = vmul.f32 %v750, %v837
        %v887 = vmul.f32 %v751, %v841
        %v888 = vmul.f32 %v752, %v837
        %v889 = vmul.f32 %v753, %v841
        %v890 = vmul.f32 %v754, %v837
        %v891 = vmul.f32 %v755, %v841
        %v892 = vmul.f32 %v756, %v837
        %v893 = vmul.f32 %v757, %v841
        %v894 = vmul.f32 %v758, %v837
        %v895 = vmul.f32 %v759, %v841
        %v896 = vmul.f32 %v760, %v837
        %v897 = vmul.f32 %v761, %v841
        %v898 = vmul.f32 %v762, %v837
        %v899 = vmul.f32 %v763, %v841
        %v900 = vmul.f32 %v764, %v837
        %v901 = vmul.f32 %v765, %v841
        %v902 = vmul.f32 %v766, %v837
        %v903 = vmul.f32 %v767, %v841
        %v904 = vmul.f32 %v768, %v837
        %v905 = vmul.f32 %v769, %v841
        %v906 = vlaneseq
        %v907 = vshrl.u32 %v906, 7
        %v908 = vsub.s32 3, %v907
        %v909 = vrot.slane %v316, %v908
        %v910 = vlaneseq
        %v911 = vshrl.u32 %v910, 7
        %v912 = vsub.s32 3, %v911
        %v913 = vrot.slane %v317, %v912
        %v914 = vmul.f32 %v252, %v909
        %v915 = vmul.f32 %v253, %v913
        %v916 = vmul.f32 %v254, %v909
        %v917 = vmul.f32 %v255, %v913
        %v918 = vmul.f32 %v256, %v909
        %v919 = vmul.f32 %v257, %v913
        %v920 = vmul.f32 %v258, %v909
        %v921 = vmul.f32 %v259, %v913
        %v922 = vmul.f32 %v260, %v909
        %v923 = vmul.f32 %v261, %v913
        %v924 = vmul.f32 %v262, %v909
        %v925 = vmul.f32 %v263, %v913
        %v926 = vmul.f32 %v264, %v909
        %v927 = vmul.f32 %v265, %v913
        %v928 = vmul.f32 %v266, %v909
        %v929 = vmul.f32 %v267, %v913
        %v930 = vmul.f32 %v268, %v909
        %v931 = vmul.f32 %v269, %v913
        %v932 = vmul.f32 %v270, %v909
        %v933 = vmul.f32 %v271, %v913
        %v934 = vmul.f32 %v272, %v909
        %v935 = vmul.f32 %v273, %v913
        %v936 = vmul.f32 %v274, %v909
        %v937 = vmul.f32 %v275, %v913
        %v938 = vmul.f32 %v276, %v909
        %v939 = vmul.f32 %v277, %v913
        %v940 = vmul.f32 %v278, %v909
        %v941 = vmul.f32 %v279, %v913
        %v942 = vmul.f32 %v280, %v909
        %v943 = vmul.f32 %v281, %v913
        %v944 = vmul.f32 %v282, %v909
        %v945 = vmul.f32 %v283, %v913
        %v946 = vmul.f32 %v284, %v909
        %v947 = vmul.f32 %v285, %v913
        %v948 = vmul.f32 %v286, %v909
        %v949 = vmul.f32 %v287, %v913
        %v950 = vmul.f32 %v288, %v909
        %v951 = vmul.f32 %v289, %v913
        %v952 = vmul.f32 %v290, %v909
        %v953 = vmul.f32 %v291, %v913
        %v954 = vmul.f32 %v292, %v909
        %v955 = vmul.f32 %v293, %v913
        %v956 = vmul.f32 %v294, %v909
        %v957 = vmul.f32 %v295, %v913
        %v958 = vmul.f32 %v296, %v909
        %v959 = vmul.f32 %v297, %v913
        %v960 = vmul.f32 %v298, %v909
        %v961 = vmul.f32 %v299, %v913
        %v962 = vmul.f32 %v300, %v909
        %v963 = vmul.f32 %v301, %v913
        %v964 = vmul.f32 %v302, %v909
        %v965 = vmul.f32 %v303, %v913
        %v966 = vmul.f32 %v304, %v909
        %v967 = vmul.f32 %v305, %v913
        %v968 = vmul.f32 %v306, %v909
        %v969 = vmul.f32 %v307, %v913
        %v970 = vmul.f32 %v308, %v909
        %v971 = vmul.f32 %v309, %v913
        %v972 = vmul.f32 %v310, %v909
        %v973 = vmul.f32 %v311, %v913
        %v974 = vmul.f32 %v312, %v909
        %v975 = vmul.f32 %v313, %v913
        %v976 = vmul.f32 %v314, %v909
        %v977 = vmul.f32 %v315, %v913
        %v978 = vadd.f32 %v842, %v914
        %v979 = vadd.f32 %v843, %v915
        %v980 = vadd.f32 %v844, %v916
        %v981 = vadd.f32 %v845, %v917
        %v982 = vadd.f32 %v846, %v918
        %v983 = vadd.f32 %v847, %v919
        %v984 = vadd.f32 %v848, %v920
        %v985 = vadd.f32 %v849, %v921
        %v986 = vadd.f32 %v850, %v922
        %v987 = vadd.f32 %v851, %v923
        %v988 = vadd.f32 %v852, %v924
        %v989 = vadd.f32 %v853, %v925
        %v990 = vadd.f32 %v854, %v926
        %v991 = vadd.f32 %v855, %v927
        %v992 = vadd.f32 %v856, %v928
        %v993 = vadd.f32 %v857, %v929
        %v994 = vadd.f32 %v858, %v930
        %v995 = vadd.f32 %v859, %v931
        %v996 = vadd.f32 %v860, %v932
        %v997 = vadd.f32 %v861, %v933
        %v998 = vadd.f32 %v862, %v934
        %v999 = vadd.f32 %v863, %v935
        %v1000 = vadd.f32 %v864, %v936
        %v1001 = vadd.f32 %v865, %v937
        %v1002 = vadd.f32 %v866, %v938
        %v1003 = vadd.f32 %v867, %v939
        %v1004 = vadd.f32 %v868, %v940
        %v1005 = vadd.f32 %v869, %v941
        %v1006 = vadd.f32 %v870, %v942
        %v1007 = vadd.f32 %v871, %v943
        %v1008 = vadd.f32 %v872, %v944
        %v1009 = vadd.f32 %v873, %v945
        %v1010 = vadd.f32 %v874, %v946
        %v1011 = vadd.f32 %v875, %v947
        %v1012 = vadd.f32 %v876, %v948
        %v1013 = vadd.f32 %v877, %v949
        %v1014 = vadd.f32 %v878, %v950
        %v1015 = vadd.f32 %v879, %v951
        %v1016 = vadd.f32 %v880, %v952
        %v1017 = vadd.f32 %v881, %v953
        %v1018 = vadd.f32 %v882, %v954
        %v1019 = vadd.f32 %v883, %v955
        %v1020 = vadd.f32 %v884, %v956
        %v1021 = vadd.f32 %v885, %v957
        %v1022 = vadd.f32 %v886, %v958
        %v1023 = vadd.f32 %v887, %v959
        %v1024 = vadd.f32 %v888, %v960
        %v1025 = vadd.f32 %v889, %v961
        %v1026 = vadd.f32 %v890, %v962
        %v1027 = vadd.f32 %v891, %v963
        %v1028 = vadd.f32 %v892, %v964
        %v1029 = vadd.f32 %v893, %v965
        %v1030 = vadd.f32 %v894, %v966
        %v1031 = vadd.f32 %v895, %v967
        %v1032 = vadd.f32 %v896, %v968
        %v1033 = vadd.f32 %v897, %v969
        %v1034 = vadd.f32 %v898, %v970
        %v1035 = vadd.f32 %v899, %v971
        %v1036 = vadd.f32 %v900, %v972
        %v1037 = vadd.f32 %v901, %v973
        %v1038 = vadd.f32 %v902, %v974
        %v1039 = vadd.f32 %v903, %v975
        %v1040 = vadd.f32 %v904, %v976
        %v1041 = vadd.f32 %v905, %v977
        %v1042 = vlaneseq
        %v1043 = vshrl.u32 %v1042, 7
        %v1044 = vsub.s32 6, %v1043
        %v1045 = vrot.slane %v316, %v1044
        %v1046 = vlaneseq
        %v1047 = vshrl.u32 %v1046, 7
        %v1048 = vsub.s32 6, %v1047
        %v1049 = vrot.slane %v317, %v1048
        %v1050 = vmul.f32 %v770, %v1045
        %v1051 = vmul.f32 %v771, %v1049
        %v1052 = vmul.f32 %v772, %v1045
        %v1053 = vmul.f32 %v773, %v1049
        %v1054 = vmul.f32 %v774, %v1045
        %v1055 = vmul.f32 %v775, %v1049
        %v1056 = vmul.f32 %v776, %v1045
        %v1057 = vmul.f32 %v777, %v1049
        %v1058 = vmul.f32 %v778, %v1045
        %v1059 = vmul.f32 %v779, %v1049
        %v1060 = vmul.f32 %v780, %v1045
        %v1061 = vmul.f32 %v781, %v1049
        %v1062 = vmul.f32 %v782, %v1045
        %v1063 = vmul.f32 %v783, %v1049
        %v1064 = vmul.f32 %v784, %v1045
        %v1065 = vmul.f32 %v785, %v1049
        %v1066 = vmul.f32 %v786, %v1045
        %v1067 = vmul.f32 %v787, %v1049
        %v1068 = vmul.f32 %v788, %v1045
        %v1069 = vmul.f32 %v789, %v1049
        %v1070 = vmul.f32 %v790, %v1045
        %v1071 = vmul.f32 %v791, %v1049
        %v1072 = vmul.f32 %v792, %v1045
        %v1073 = vmul.f32 %v793, %v1049
        %v1074 = vmul.f32 %v794, %v1045
        %v1075 = vmul.f32 %v795, %v1049
        %v1076 = vmul.f32 %v796, %v1045
        %v1077 = vmul.f32 %v797, %v1049
        %v1078 = vmul.f32 %v798, %v1045
        %v1079 = vmul.f32 %v799, %v1049
        %v1080 = vmul.f32 %v800, %v1045
        %v1081 = vmul.f32 %v801, %v1049
        %v1082 = vmul.f32 %v802, %v1045
        %v1083 = vmul.f32 %v803, %v1049
        %v1084 = vmul.f32 %v804, %v1045
        %v1085 = vmul.f32 %v805, %v1049
        %v1086 = vmul.f32 %v806, %v1045
        %v1087 = vmul.f32 %v807, %v1049
        %v1088 = vmul.f32 %v808, %v1045
        %v1089 = vmul.f32 %v809, %v1049
        %v1090 = vmul.f32 %v810, %v1045
        %v1091 = vmul.f32 %v811, %v1049
        %v1092 = vmul.f32 %v812, %v1045
        %v1093 = vmul.f32 %v813, %v1049
        %v1094 = vmul.f32 %v814, %v1045
        %v1095 = vmul.f32 %v815, %v1049
        %v1096 = vmul.f32 %v816, %v1045
        %v1097 = vmul.f32 %v817, %v1049
        %v1098 = vmul.f32 %v818, %v1045
        %v1099 = vmul.f32 %v819, %v1049
        %v1100 = vmul.f32 %v820, %v1045
        %v1101 = vmul.f32 %v821, %v1049
        %v1102 = vmul.f32 %v822, %v1045
        %v1103 = vmul.f32 %v823, %v1049
        %v1104 = vmul.f32 %v824, %v1045
        %v1105 = vmul.f32 %v825, %v1049
        %v1106 = vmul.f32 %v826, %v1045
        %v1107 = vmul.f32 %v827, %v1049
        %v1108 = vmul.f32 %v828, %v1045
        %v1109 = vmul.f32 %v829, %v1049
        %v1110 = vmul.f32 %v830, %v1045
        %v1111 = vmul.f32 %v831, %v1049
        %v1112 = vmul.f32 %v832, %v1045
        %v1113 = vmul.f32 %v833, %v1049
        %v1114 = vadd.f32 %v978, %v1050
        %v1115 = vadd.f32 %v979, %v1051
        %v1116 = vadd.f32 %v980, %v1052
        %v1117 = vadd.f32 %v981, %v1053
        %v1118 = vadd.f32 %v982, %v1054
        %v1119 = vadd.f32 %v983, %v1055
        %v1120 = vadd.f32 %v984, %v1056
        %v1121 = vadd.f32 %v985, %v1057
        %v1122 = vadd.f32 %v986, %v1058
        %v1123 = vadd.f32 %v987, %v1059
        %v1124 = vadd.f32 %v988, %v1060
        %v1125 = vadd.f32 %v989, %v1061
        %v1126 = vadd.f32 %v990, %v1062
        %v1127 = vadd.f32 %v991, %v1063
        %v1128 = vadd.f32 %v992, %v1064
        %v1129 = vadd.f32 %v993, %v1065
        %v1130 = vadd.f32 %v994, %v1066
        %v1131 = vadd.f32 %v995, %v1067
        %v1132 = vadd.f32 %v996, %v1068
        %v1133 = vadd.f32 %v997, %v1069
        %v1134 = vadd.f32 %v998, %v1070
        %v1135 = vadd.f32 %v999, %v1071
        %v1136 = vadd.f32 %v1000, %v1072
        %v1137 = vadd.f32 %v1001, %v1073
        %v1138 = vadd.f32 %v1002, %v1074
        %v1139 = vadd.f32 %v1003, %v1075
        %v1140 = vadd.f32 %v1004, %v1076
        %v1141 = vadd.f32 %v1005, %v1077
        %v1142 = vadd.f32 %v1006, %v1078
        %v1143 = vadd.f32 %v1007, %v1079
        %v1144 = vadd.f32 %v1008, %v1080
        %v1145 = vadd.f32 %v1009, %v1081
        %v1146 = vadd.f32 %v1010, %v1082
        %v1147 = vadd.f32 %v1011, %v1083
        %v1148 = vadd.f32 %v1012, %v1084
        %v1149 = vadd.f32 %v1013, %v1085
        %v1150 = vadd.f32 %v1014, %v1086
        %v1151 = vadd.f32 %v1015, %v1087
        %v1152 = vadd.f32 %v1016, %v1088
        %v1153 = vadd.f32 %v1017, %v1089
        %v1154 = vadd.f32 %v1018, %v1090
        %v1155 = vadd.f32 %v1019, %v1091
        %v1156 = vadd.f32 %v1020, %v1092
        %v1157 = vadd.f32 %v1021, %v1093
        %v1158 = vadd.f32 %v1022, %v1094
        %v1159 = vadd.f32 %v1023, %v1095
        %v1160 = vadd.f32 %v1024, %v1096
        %v1161 = vadd.f32 %v1025, %v1097
        %v1162 = vadd.f32 %v1026, %v1098
        %v1163 = vadd.f32 %v1027, %v1099
        %v1164 = vadd.f32 %v1028, %v1100
        %v1165 = vadd.f32 %v1029, %v1101
        %v1166 = vadd.f32 %v1030, %v1102
        %v1167 = vadd.f32 %v1031, %v1103
        %v1168 = vadd.f32 %v1032, %v1104
        %v1169 = vadd.f32 %v1033, %v1105
        %v1170 = vadd.f32 %v1034, %v1106
        %v1171 = vadd.f32 %v1035, %v1107
        %v1172 = vadd.f32 %v1036, %v1108
        %v1173 = vadd.f32 %v1037, %v1109
        %v1174 = vadd.f32 %v1038, %v1110
        %v1175 = vadd.f32 %v1039, %v1111
        %v1176 = vadd.f32 %v1040, %v1112
        %v1177 = vadd.f32 %v1041, %v1113
        %v1178 = vlaneseq
        %v1179 = vshrl.u32 %v1178, 7
        %v1180 = vsub.s32 1, %v1179
        %v1181 = vrot.slane %v316, %v1180
        %v1182 = vlaneseq
        %v1183 = vshrl.u32 %v1182, 7
        %v1184 = vsub.s32 1, %v1183
        %v1185 = vrot.slane %v317, %v1184
        %v1186 = vmul.f32 %v706, %v1181
        %v1187 = vmul.f32 %v707, %v1185
        %v1188 = vmul.f32 %v708, %v1181
        %v1189 = vmul.f32 %v709, %v1185
        %v1190 = vmul.f32 %v710, %v1181
        %v1191 = vmul.f32 %v711, %v1185
        %v1192 = vmul.f32 %v712, %v1181
        %v1193 = vmul.f32 %v713, %v1185
        %v1194 = vmul.f32 %v714, %v1181
        %v1195 = vmul.f32 %v715, %v1185
        %v1196 = vmul.f32 %v716, %v1181
        %v1197 = vmul.f32 %v717, %v1185
        %v1198 = vmul.f32 %v718, %v1181
        %v1199 = vmul.f32 %v719, %v1185
        %v1200 = vmul.f32 %v720, %v1181
        %v1201 = vmul.f32 %v721, %v1185
        %v1202 = vmul.f32 %v722, %v1181
        %v1203 = vmul.f32 %v723, %v1185
        %v1204 = vmul.f32 %v724, %v1181
        %v1205 = vmul.f32 %v725, %v1185
        %v1206 = vmul.f32 %v726, %v1181
        %v1207 = vmul.f32 %v727, %v1185
        %v1208 = vmul.f32 %v728, %v1181
        %v1209 = vmul.f32 %v729, %v1185
        %v1210 = vmul.f32 %v730, %v1181
        %v1211 = vmul.f32 %v731, %v1185
        %v1212 = vmul.f32 %v732, %v1181
        %v1213 = vmul.f32 %v733, %v1185
        %v1214 = vmul.f32 %v734, %v1181
        %v1215 = vmul.f32 %v735, %v1185
        %v1216 = vmul.f32 %v736, %v1181
        %v1217 = vmul.f32 %v737, %v1185
        %v1218 = vmul.f32 %v738, %v1181
        %v1219 = vmul.f32 %v739, %v1185
        %v1220 = vmul.f32 %v740, %v1181
        %v1221 = vmul.f32 %v741, %v1185
        %v1222 = vmul.f32 %v742, %v1181
        %v1223 = vmul.f32 %v743, %v1185
        %v1224 = vmul.f32 %v744, %v1181
        %v1225 = vmul.f32 %v745, %v1185
        %v1226 = vmul.f32 %v746, %v1181
        %v1227 = vmul.f32 %v747, %v1185
        %v1228 = vmul.f32 %v748, %v1181
        %v1229 = vmul.f32 %v749, %v1185
        %v1230 = vmul.f32 %v750, %v1181
        %v1231 = vmul.f32 %v751, %v1185
        %v1232 = vmul.f32 %v752, %v1181
        %v1233 = vmul.f32 %v753, %v1185
        %v1234 = vmul.f32 %v754, %v1181
        %v1235 = vmul.f32 %v755, %v1185
        %v1236 = vmul.f32 %v756, %v1181
        %v1237 = vmul.f32 %v757, %v1185
        %v1238 = vmul.f32 %v758, %v1181
        %v1239 = vmul.f32 %v759, %v1185
        %v1240 = vmul.f32 %v760, %v1181
        %v1241 = vmul.f32 %v761, %v1185
        %v1242 = vmul.f32 %v762, %v1181
        %v1243 = vmul.f32 %v763, %v1185
        %v1244 = vmul.f32 %v764, %v1181
        %v1245 = vmul.f32 %v765, %v1185
        %v1246 = vmul.f32 %v766, %v1181
        %v1247 = vmul.f32 %v767, %v1185
        %v1248 = vmul.f32 %v768, %v1181
        %v1249 = vmul.f32 %v769, %v1185
        %v1250 = vlaneseq
        %v1251 = vshrl.u32 %v1250, 7
        %v1252 = vsub.s32 4, %v1251
        %v1253 = vrot.slane %v316, %v1252
        %v1254 = vlaneseq
        %v1255 = vshrl.u32 %v1254, 7
        %v1256 = vsub.s32 4, %v1255
        %v1257 = vrot.slane %v317, %v1256
        %v1258 = vmul.f32 %v252, %v1253
        %v1259 = vmul.f32 %v253, %v1257
        %v1260 = vmul.f32 %v254, %v1253
        %v1261 = vmul.f32 %v255, %v1257
        %v1262 = vmul.f32 %v256, %v1253
        %v1263 = vmul.f32 %v257, %v1257
        %v1264 = vmul.f32 %v258, %v1253
        %v1265 = vmul.f32 %v259, %v1257
        %v1266 = vmul.f32 %v260, %v1253
        %v1267 = vmul.f32 %v261, %v1257
        %v1268 = vmul.f32 %v262, %v1253
        %v1269 = vmul.f32 %v263, %v1257
        %v1270 = vmul.f32 %v264, %v1253
        %v1271 = vmul.f32 %v265, %v1257
        %v1272 = vmul.f32 %v266, %v1253
        %v1273 = vmul.f32 %v267, %v1257
        %v1274 = vmul.f32 %v268, %v1253
        %v1275 = vmul.f32 %v269, %v1257
        %v1276 = vmul.f32 %v270, %v1253
        %v1277 = vmul.f32 %v271, %v1257
        %v1278 = vmul.f32 %v272, %v1253
        %v1279 = vmul.f32 %v273, %v1257
        %v1280 = vmul.f32 %v274, %v1253
        %v1281 = vmul.f32 %v275, %v1257
        %v1282 = vmul.f32 %v276, %v1253
        %v1283 = vmul.f32 %v277, %v1257
        %v1284 = vmul.f32 %v278, %v1253
        %v1285 = vmul.f32 %v279, %v1257
        %v1286 = vmul.f32 %v280, %v1253
        %v1287 = vmul.f32 %v281, %v1257
        %v1288 = vmul.f32 %v282, %v1253
        %v1289 = vmul.f32 %v283, %v1257
        %v1290 = vmul.f32 %v284, %v1253
        %v1291 = vmul.f32 %v285, %v1257
        %v1292 = vmul.f32 %v286, %v1253
        %v1293 = vmul.f32 %v287, %v1257
        %v1294 = vmul.f32 %v288, %v1253
        %v1295 = vmul.f32 %v289, %v1257
        %v1296 = vmul.f32 %v290, %v1253
        %v1297 = vmul.f32 %v291, %v1257
        %v1298 = vmul.f32 %v292, %v1253
        %v1299 = vmul.f32 %v293, %v1257
        %v1300 = vmul.f32 %v294, %v1253
        %v1301 = vmul.f32 %v295, %v1257
        %v1302 = vmul.f32 %v296, %v1253
        %v1303 = vmul.f32 %v297, %v1257
        %v1304 = vmul.f32 %v298, %v1253
        %v1305 = vmul.f32 %v299, %v1257
        %v1306 = vmul.f32 %v300, %v1253
        %v1307 = vmul.f32 %v301, %v1257
        %v1308 = vmul.f32 %v302, %v1253
        %v1309 = vmul.f32 %v303, %v1257
        %v1310 = vmul.f32 %v304, %v1253
        %v1311 = vmul.f32 %v305, %v1257
        %v1312 = vmul.f32 %v306, %v1253
        %v1313 = vmul.f32 %v307, %v1257
        %v1314 = vmul.f32 %v308, %v1253
        %v1315 = vmul.f32 %v309, %v1257
        %v1316 = vmul.f32 %v310, %v1253
        %v1317 = vmul.f32 %v311, %v1257
        %v1318 = vmul.f32 %v312, %v1253
        %v1319 = vmul.f32 %v313, %v1257
        %v1320 = vmul.f32 %v314, %v1253
        %v1321 = vmul.f32 %v315, %v1257
        %v1322 = vadd.f32 %v1186, %v1258
        %v1323 = vadd.f32 %v1187, %v1259
        %v1324 = vadd.f32 %v1188, %v1260
        %v1325 = vadd.f32 %v1189, %v1261
        %v1326 = vadd.f32 %v1190, %v1262
        %v1327 = vadd.f32 %v1191, %v1263
        %v1328 = vadd.f32 %v1192, %v1264
        %v1329 = vadd.f32 %v1193, %v1265
        %v1330 = vadd.f32 %v1194, %v1266
        %v1331 = vadd.f32 %v1195, %v1267
        %v1332 = vadd.f32 %v1196, %v1268
        %v1333 = vadd.f32 %v1197, %v1269
        %v1334 = vadd.f32 %v1198, %v1270
        %v1335 = vadd.f32 %v1199, %v1271
        %v1336 = vadd.f32 %v1200, %v1272
        %v1337 = vadd.f32 %v1201, %v1273
        %v1338 = vadd.f32 %v1202, %v1274
        %v1339 = vadd.f32 %v1203, %v1275
        %v1340 = vadd.f32 %v1204, %v1276
        %v1341 = vadd.f32 %v1205, %v1277
        %v1342 = vadd.f32 %v1206, %v1278
        %v1343 = vadd.f32 %v1207, %v1279
        %v1344 = vadd.f32 %v1208, %v1280
        %v1345 = vadd.f32 %v1209, %v1281
        %v1346 = vadd.f32 %v1210, %v1282
        %v1347 = vadd.f32 %v1211, %v1283
        %v1348 = vadd.f32 %v1212, %v1284
        %v1349 = vadd.f32 %v1213, %v1285
        %v1350 = vadd.f32 %v1214, %v1286
        %v1351 = vadd.f32 %v1215, %v1287
        %v1352 = vadd.f32 %v1216, %v1288
        %v1353 = vadd.f32 %v1217, %v1289
        %v1354 = vadd.f32 %v1218, %v1290
        %v1355 = vadd.f32 %v1219, %v1291
        %v1356 = vadd.f32 %v1220, %v1292
        %v1357 = vadd.f32 %v1221, %v1293
        %v1358 = vadd.f32 %v1222, %v1294
        %v1359 = vadd.f32 %v1223, %v1295
        %v1360 = vadd.f32 %v1224, %v1296
        %v1361 = vadd.f32 %v1225, %v1297
        %v1362 = vadd.f32 %v1226, %v1298
        %v1363 = vadd.f32 %v1227, %v1299
        %v1364 = vadd.f32 %v1228, %v1300
        %v1365 = vadd.f32 %v1229, %v1301
        %v1366 = vadd.f32 %v1230, %v1302
        %v1367 = vadd.f32 %v1231, %v1303
        %v1368 = vadd.f32 %v1232, %v1304
        %v1369 = vadd.f32 %v1233, %v1305
        %v1370 = vadd.f32 %v1234, %v1306
        %v1371 = vadd.f32 %v1235, %v1307
        %v1372 = vadd.f32 %v1236, %v1308
        %v1373 = vadd.f32 %v1237, %v1309
        %v1374 = vadd.f32 %v1238, %v1310
        %v1375 = vadd.f32 %v1239, %v1311
        %v1376 = vadd.f32 %v1240, %v1312
        %v1377 = vadd.f32 %v1241, %v1313
        %v1378 = vadd.f32 %v1242, %v1314
        %v1379 = vadd.f32 %v1243, %v1315
        %v1380 = vadd.f32 %v1244, %v1316
        %v1381 = vadd.f32 %v1245, %v1317
        %v1382 = vadd.f32 %v1246, %v1318
        %v1383 = vadd.f32 %v1247, %v1319
        %v1384 = vadd.f32 %v1248, %v1320
        %v1385 = vadd.f32 %v1249, %v1321
        %v1386 = vlaneseq
        %v1387 = vshrl.u32 %v1386, 7
        %v1388 = vsub.s32 7, %v1387
        %v1389 = vrot.slane %v316, %v1388
        %v1390 = vlaneseq
        %v1391 = vshrl.u32 %v1390, 7
        %v1392 = vsub.s32 7, %v1391
        %v1393 = vrot.slane %v317, %v1392
        %v1394 = vmul.f32 %v770, %v1389
        %v1395 = vmul.f32 %v771, %v1393
        %v1396 = vmul.f32 %v772, %v1389
        %v1397 = vmul.f32 %v773, %v1393
        %v1398 = vmul.f32 %v774, %v1389
        %v1399 = vmul.f32 %v775, %v1393
        %v1400 = vmul.f32 %v776, %v1389
        %v1401 = vmul.f32 %v777, %v1393
        %v1402 = vmul.f32 %v778, %v1389
        %v1403 = vmul.f32 %v779, %v1393
        %v1404 = vmul.f32 %v780, %v1389
        %v1405 = vmul.f32 %v781, %v1393
        %v1406 = vmul.f32 %v782, %v1389
        %v1407 = vmul.f32 %v783, %v1393
        %v1408 = vmul.f32 %v784, %v1389
        %v1409 = vmul.f32 %v785, %v1393
        %v1410 = vmul.f32 %v786, %v1389
        %v1411 = vmul.f32 %v787, %v1393
        %v1412 = vmul.f32 %v788, %v1389
        %v1413 = vmul.f32 %v789, %v1393
        %v1414 = vmul.f32 %v790, %v1389
        %v1415 = vmul.f32 %v791, %v1393
        %v1416 = vmul.f32 %v792, %v1389
        %v1417 = vmul.f32 %v793, %v1393
        %v1418 = vmul.f32 %v794, %v1389
        %v1419 = vmul.f32 %v795, %v1393
        %v1420 = vmul.f32 %v796, %v1389
        %v1421 = vmul.f32 %v797, %v1393
        %v1422 = vmul.f32 %v798, %v1389
        %v1423 = vmul.f32 %v799, %v1393
        %v1424 = vmul.f32 %v800, %v1389
        %v1425 = vmul.f32 %v801, %v1393
        %v1426 = vmul.f32 %v802, %v1389
        %v1427 = vmul.f32 %v803, %v1393
        %v1428 = vmul.f32 %v804, %v1389
        %v1429 = vmul.f32 %v805, %v1393
        %v1430 = vmul.f32 %v806, %v1389
        %v1431 = vmul.f32 %v807, %v1393
        %v1432 = vmul.f32 %v808, %v1389
        %v1433 = vmul.f32 %v809, %v1393
        %v1434 = vmul.f32 %v810, %v1389
        %v1435 = vmul.f32 %v811, %v1393
        %v1436 = vmul.f32 %v812, %v1389
        %v1437 = vmul.f32 %v813, %v1393
        %v1438 = vmul.f32 %v814, %v1389
        %v1439 = vmul.f32 %v815, %v1393
        %v1440 = vmul.f32 %v816, %v1389
        %v1441 = vmul.f32 %v817, %v1393
        %v1442 = vmul.f32 %v818, %v1389
        %v1443 = vmul.f32 %v819, %v1393
        %v1444 = vmul.f32 %v820, %v1389
        %v1445 = vmul.f32 %v821, %v1393
        %v1446 = vmul.f32 %v822, %v1389
        %v1447 = vmul.f32 %v823, %v1393
        %v1448 = vmul.f32 %v824, %v1389
        %v1449 = vmul.f32 %v825, %v1393
        %v1450 = vmul.f32 %v826, %v1389
        %v1451 = vmul.f32 %v827, %v1393
        %v1452 = vmul.f32 %v828, %v1389
        %v1453 = vmul.f32 %v829, %v1393
        %v1454 = vmul.f32 %v830, %v1389
        %v1455 = vmul.f32 %v831, %v1393
        %v1456 = vmul.f32 %v832, %v1389
        %v1457 = vmul.f32 %v833, %v1393
        %v1458 = vadd.f32 %v1322, %v1394
        %v1459 = vadd.f32 %v1323, %v1395
        %v1460 = vadd.f32 %v1324, %v1396
        %v1461 = vadd.f32 %v1325, %v1397
        %v1462 = vadd.f32 %v1326, %v1398
        %v1463 = vadd.f32 %v1327, %v1399
        %v1464 = vadd.f32 %v1328, %v1400
        %v1465 = vadd.f32 %v1329, %v1401
        %v1466 = vadd.f32 %v1330, %v1402
        %v1467 = vadd.f32 %v1331, %v1403
        %v1468 = vadd.f32 %v1332, %v1404
        %v1469 = vadd.f32 %v1333, %v1405
        %v1470 = vadd.f32 %v1334, %v1406
        %v1471 = vadd.f32 %v1335, %v1407
        %v1472 = vadd.f32 %v1336, %v1408
        %v1473 = vadd.f32 %v1337, %v1409
        %v1474 = vadd.f32 %v1338, %v1410
        %v1475 = vadd.f32 %v1339, %v1411
        %v1476 = vadd.f32 %v1340, %v1412
        %v1477 = vadd.f32 %v1341, %v1413
        %v1478 = vadd.f32 %v1342, %v1414
        %v1479 = vadd.f32 %v1343, %v1415
        %v1480 = vadd.f32 %v1344, %v1416
        %v1481 = vadd.f32 %v1345, %v1417
        %v1482 = vadd.f32 %v1346, %v1418
        %v1483 = vadd.f32 %v1347, %v1419
        %v1484 = vadd.f32 %v1348, %v1420
        %v1485 = vadd.f32 %v1349, %v1421
        %v1486 = vadd.f32 %v1350, %v1422
        %v1487 = vadd.f32 %v1351, %v1423
        %v1488 = vadd.f32 %v1352, %v1424
        %v1489 = vadd.f32 %v1353, %v1425
        %v1490 = vadd.f32 %v1354, %v1426
        %v1491 = vadd.f32 %v1355, %v1427
        %v1492 = vadd.f32 %v1356, %v1428
        %v1493 = vadd.f32 %v1357, %v1429
        %v1494 = vadd.f32 %v1358, %v1430
        %v1495 = vadd.f32 %v1359, %v1431
        %v1496 = vadd.f32 %v1360, %v1432
        %v1497 = vadd.f32 %v1361, %v1433
        %v1498 = vadd.f32 %v1362, %v1434
        %v1499 = vadd.f32 %v1363, %v1435
        %v1500 = vadd.f32 %v1364, %v1436
        %v1501 = vadd.f32 %v1365, %v1437
        %v1502 = vadd.f32 %v1366, %v1438
        %v1503 = vadd.f32 %v1367, %v1439
        %v1504 = vadd.f32 %v1368, %v1440
        %v1505 = vadd.f32 %v1369, %v1441
        %v1506 = vadd.f32 %v1370, %v1442
        %v1507 = vadd.f32 %v1371, %v1443
        %v1508 = vadd.f32 %v1372, %v1444
        %v1509 = vadd.f32 %v1373, %v1445
        %v1510 = vadd.f32 %v1374, %v1446
        %v1511 = vadd.f32 %v1375, %v1447
        %v1512 = vadd.f32 %v1376, %v1448
        %v1513 = vadd.f32 %v1377, %v1449
        %v1514 = vadd.f32 %v1378, %v1450
        %v1515 = vadd.f32 %v1379, %v1451
        %v1516 = vadd.f32 %v1380, %v1452
        %v1517 = vadd.f32 %v1381, %v1453
        %v1518 = vadd.f32 %v1382, %v1454
        %v1519 = vadd.f32 %v1383, %v1455
        %v1520 = vadd.f32 %v1384, %v1456
        %v1521 = vadd.f32 %v1385, %v1457
        %v1522 = vlaneseq
        %v1523 = vshrl.u32 %v1522, 7
        %v1524 = vsub.s32 2, %v1523
        %v1525 = vrot.slane %v316, %v1524
        %v1526 = vlaneseq
        %v1527 = vshrl.u32 %v1526, 7
        %v1528 = vsub.s32 2, %v1527
        %v1529 = vrot.slane %v317, %v1528
        %v1530 = vmul.f32 %v706, %v1525
        %v1531 = vmul.f32 %v707, %v1529
        %v1532 = vmul.f32 %v708, %v1525
        %v1533 = vmul.f32 %v709, %v1529
        %v1534 = vmul.f32 %v710, %v1525
        %v1535 = vmul.f32 %v711, %v1529
        %v1536 = vmul.f32 %v712, %v1525
        %v1537 = vmul.f32 %v713, %v1529
        %v1538 = vmul.f32 %v714, %v1525
        %v1539 = vmul.f32 %v715, %v1529
        %v1540 = vmul.f32 %v716, %v1525
        %v1541 = vmul.f32 %v717, %v1529
        %v1542 = vmul.f32 %v718, %v1525
        %v1543 = vmul.f32 %v719, %v1529
        %v1544 = vmul.f32 %v720, %v1525
        %v1545 = vmul.f32 %v721, %v1529
        %v1546 = vmul.f32 %v722, %v1525
        %v1547 = vmul.f32 %v723, %v1529
        %v1548 = vmul.f32 %v724, %v1525
        %v1549 = vmul.f32 %v725, %v1529
        %v1550 = vmul.f32 %v726, %v1525
        %v1551 = vmul.f32 %v727, %v1529
        %v1552 = vmul.f32 %v728, %v1525
        %v1553 = vmul.f32 %v729, %v1529
        %v1554 = vmul.f32 %v730, %v1525
        %v1555 = vmul.f32 %v731, %v1529
        %v1556 = vmul.f32 %v732, %v1525
        %v1557 = vmul.f32 %v733, %v1529
        %v1558 = vmul.f32 %v734, %v1525
        %v1559 = vmul.f32 %v735, %v1529
        %v1560 = vmul.f32 %v736, %v1525
        %v1561 = vmul.f32 %v737, %v1529
        %v1562 = vmul.f32 %v738, %v1525
        %v1563 = vmul.f32 %v739, %v1529
        %v1564 = vmul.f32 %v740, %v1525
        %v1565 = vmul.f32 %v741, %v1529
        %v1566 = vmul.f32 %v742, %v1525
        %v1567 = vmul.f32 %v743, %v1529
        %v1568 = vmul.f32 %v744, %v1525
        %v1569 = vmul.f32 %v745, %v1529
        %v1570 = vmul.f32 %v746, %v1525
        %v1571 = vmul.f32 %v747, %v1529
        %v1572 = vmul.f32 %v748, %v1525
        %v1573 = vmul.f32 %v749, %v1529
        %v1574 = vmul.f32 %v750, %v1525
        %v1575 = vmul.f32 %v751, %v1529
        %v1576 = vmul.f32 %v752, %v1525
        %v1577 = vmul.f32 %v753, %v1529
        %v1578 = vmul.f32 %v754, %v1525
        %v1579 = vmul.f32 %v755, %v1529
        %v1580 = vmul.f32 %v756, %v1525
        %v1581 = vmul.f32 %v757, %v1529
        %v1582 = vmul.f32 %v758, %v1525
        %v1583 = vmul.f32 %v759, %v1529
        %v1584 = vmul.f32 %v760, %v1525
        %v1585 = vmul.f32 %v761, %v1529
        %v1586 = vmul.f32 %v762, %v1525
        %v1587 = vmul.f32 %v763, %v1529
        %v1588 = vmul.f32 %v764, %v1525
        %v1589 = vmul.f32 %v765, %v1529
        %v1590 = vmul.f32 %v766, %v1525
        %v1591 = vmul.f32 %v767, %v1529
        %v1592 = vmul.f32 %v768, %v1525
        %v1593 = vmul.f32 %v769, %v1529
        %v1594 = vlaneseq
        %v1595 = vshrl.u32 %v1594, 7
        %v1596 = vsub.s32 5, %v1595
        %v1597 = vrot.slane %v316, %v1596
        %v1598 = vlaneseq
        %v1599 = vshrl.u32 %v1598, 7
        %v1600 = vsub.s32 5, %v1599
        %v1601 = vrot.slane %v317, %v1600
        %v1602 = vmul.f32 %v252, %v1597
        %v1603 = vmul.f32 %v253, %v1601
        %v1604 = vmul.f32 %v254, %v1597
        %v1605 = vmul.f32 %v255, %v1601
        %v1606 = vmul.f32 %v256, %v1597
        %v1607 = vmul.f32 %v257, %v1601
        %v1608 = vmul.f32 %v258, %v1597
        %v1609 = vmul.f32 %v259, %v1601
        %v1610 = vmul.f32 %v260, %v1597
        %v1611 = vmul.f32 %v261, %v1601
        %v1612 = vmul.f32 %v262, %v1597
        %v1613 = vmul.f32 %v263, %v1601
        %v1614 = vmul.f32 %v264, %v1597
        %v1615 = vmul.f32 %v265, %v1601
        %v1616 = vmul.f32 %v266, %v1597
        %v1617 = vmul.f32 %v267, %v1601
        %v1618 = vmul.f32 %v268, %v1597
        %v1619 = vmul.f32 %v269, %v1601
        %v1620 = vmul.f32 %v270, %v1597
        %v1621 = vmul.f32 %v271, %v1601
        %v1622 = vmul.f32 %v272, %v1597
        %v1623 = vmul.f32 %v273, %v1601
        %v1624 = vmul.f32 %v274, %v1597
        %v1625 = vmul.f32 %v275, %v1601
        %v1626 = vmul.f32 %v276, %v1597
        %v1627 = vmul.f32 %v277, %v1601
        %v1628 = vmul.f32 %v278, %v1597
        %v1629 = vmul.f32 %v279, %v1601
        %v1630 = vmul.f32 %v280, %v1597
        %v1631 = vmul.f32 %v281, %v1601
        %v1632 = vmul.f32 %v282, %v1597
        %v1633 = vmul.f32 %v283, %v1601
        %v1634 = vmul.f32 %v284, %v1597
        %v1635 = vmul.f32 %v285, %v1601
        %v1636 = vmul.f32 %v286, %v1597
        %v1637 = vmul.f32 %v287, %v1601
        %v1638 = vmul.f32 %v288, %v1597
        %v1639 = vmul.f32 %v289, %v1601
        %v1640 = vmul.f32 %v290, %v1597
        %v1641 = vmul.f32 %v291, %v1601
        %v1642 = vmul.f32 %v292, %v1597
        %v1643 = vmul.f32 %v293, %v1601
        %v1644 = vmul.f32 %v294, %v1597
        %v1645 = vmul.f32 %v295, %v1601
        %v1646 = vmul.f32 %v296, %v1597
        %v1647 = vmul.f32 %v297, %v1601
        %v1648 = vmul.f32 %v298, %v1597
        %v1649 = vmul.f32 %v299, %v1601
        %v1650 = vmul.f32 %v300, %v1597
        %v1651 = vmul.f32 %v301, %v1601
        %v1652 = vmul.f32 %v302, %v1597
        %v1653 = vmul.f32 %v303, %v1601
        %v1654 = vmul.f32 %v304, %v1597
        %v1655 = vmul.f32 %v305, %v1601
        %v1656 = vmul.f32 %v306, %v1597
        %v1657 = vmul.f32 %v307, %v1601
        %v1658 = vmul.f32 %v308, %v1597
        %v1659 = vmul.f32 %v309, %v1601
        %v1660 = vmul.f32 %v310, %v1597
        %v1661 = vmul.f32 %v311, %v1601
        %v1662 = vmul.f32 %v312, %v1597
        %v1663 = vmul.f32 %v313, %v1601
        %v1664 = vmul.f32 %v314, %v1597
        %v1665 = vmul.f32 %v315, %v1601
        %v1666 = vadd.f32 %v1530, %v1602
        %v1667 = vadd.f32 %v1531, %v1603
        %v1668 = vadd.f32 %v1532, %v1604
        %v1669 = vadd.f32 %v1533, %v1605
        %v1670 = vadd.f32 %v1534, %v1606
        %v1671 = vadd.f32 %v1535, %v1607
        %v1672 = vadd.f32 %v1536, %v1608
        %v1673 = vadd.f32 %v1537, %v1609
        %v1674 = vadd.f32 %v1538, %v1610
        %v1675 = vadd.f32 %v1539, %v1611
        %v1676 = vadd.f32 %v1540, %v1612
        %v1677 = vadd.f32 %v1541, %v1613
        %v1678 = vadd.f32 %v1542, %v1614
        %v1679 = vadd.f32 %v1543, %v1615
        %v1680 = vadd.f32 %v1544, %v1616
        %v1681 = vadd.f32 %v1545, %v1617
        %v1682 = vadd.f32 %v1546, %v1618
        %v1683 = vadd.f32 %v1547, %v1619
        %v1684 = vadd.f32 %v1548, %v1620
        %v1685 = vadd.f32 %v1549, %v1621
        %v1686 = vadd.f32 %v1550, %v1622
        %v1687 = vadd.f32 %v1551, %v1623
        %v1688 = vadd.f32 %v1552, %v1624
        %v1689 = vadd.f32 %v1553, %v1625
        %v1690 = vadd.f32 %v1554, %v1626
        %v1691 = vadd.f32 %v1555, %v1627
        %v1692 = vadd.f32 %v1556, %v1628
        %v1693 = vadd.f32 %v1557, %v1629
        %v1694 = vadd.f32 %v1558, %v1630
        %v1695 = vadd.f32 %v1559, %v1631
        %v1696 = vadd.f32 %v1560, %v1632
        %v1697 = vadd.f32 %v1561, %v1633
        %v1698 = vadd.f32 %v1562, %v1634
        %v1699 = vadd.f32 %v1563, %v1635
        %v1700 = vadd.f32 %v1564, %v1636
        %v1701 = vadd.f32 %v1565, %v1637
        %v1702 = vadd.f32 %v1566, %v1638
        %v1703 = vadd.f32 %v1567, %v1639
        %v1704 = vadd.f32 %v1568, %v1640
        %v1705 = vadd.f32 %v1569, %v1641
        %v1706 = vadd.f32 %v1570, %v1642
        %v1707 = vadd.f32 %v1571, %v1643
        %v1708 = vadd.f32 %v1572, %v1644
        %v1709 = vadd.f32 %v1573, %v1645
        %v1710 = vadd.f32 %v1574, %v1646
        %v1711 = vadd.f32 %v1575, %v1647
        %v1712 = vadd.f32 %v1576, %v1648
        %v1713 = vadd.f32 %v1577, %v1649
        %v1714 = vadd.f32 %v1578, %v1650
        %v1715 = vadd.f32 %v1579, %v1651
        %v1716 = vadd.f32 %v1580, %v1652
        %v1717 = vadd.f32 %v1581, %v1653
        %v1718 = vadd.f32 %v1582, %v1654
        %v1719 = vadd.f32 %v1583, %v1655
        %v1720 = vadd.f32 %v1584, %v1656
        %v1721 = vadd.f32 %v1585, %v1657
        %v1722 = vadd.f32 %v1586, %v1658
        %v1723 = vadd.f32 %v1587, %v1659
        %v1724 = vadd.f32 %v1588, %v1660
        %v1725 = vadd.f32 %v1589, %v1661
        %v1726 = vadd.f32 %v1590, %v1662
        %v1727 = vadd.f32 %v1591, %v1663
        %v1728 = vadd.f32 %v1592, %v1664
        %v1729 = vadd.f32 %v1593, %v1665
        %v1730 = vlaneseq
        %v1731 = vshrl.u32 %v1730, 7
        %v1732 = vsub.s32 0, %v1731
        %v1733 = vrot.slane %v318, %v1732
        %v1734 = vlaneseq
        %v1735 = vshrl.u32 %v1734, 7
        %v1736 = vsub.s32 0, %v1735
        %v1737 = vrot.slane %v319, %v1736
        %v1738 = vmul.f32 %v770, %v1733
        %v1739 = vmul.f32 %v771, %v1737
        %v1740 = vmul.f32 %v772, %v1733
        %v1741 = vmul.f32 %v773, %v1737
        %v1742 = vmul.f32 %v774, %v1733
        %v1743 = vmul.f32 %v775, %v1737
        %v1744 = vmul.f32 %v776, %v1733
        %v1745 = vmul.f32 %v777, %v1737
        %v1746 = vmul.f32 %v778, %v1733
        %v1747 = vmul.f32 %v779, %v1737
        %v1748 = vmul.f32 %v780, %v1733
        %v1749 = vmul.f32 %v781, %v1737
        %v1750 = vmul.f32 %v782, %v1733
        %v1751 = vmul.f32 %v783, %v1737
        %v1752 = vmul.f32 %v784, %v1733
        %v1753 = vmul.f32 %v785, %v1737
        %v1754 = vmul.f32 %v786, %v1733
        %v1755 = vmul.f32 %v787, %v1737
        %v1756 = vmul.f32 %v788, %v1733
        %v1757 = vmul.f32 %v789, %v1737
        %v1758 = vmul.f32 %v790, %v1733
        %v1759 = vmul.f32 %v791, %v1737
        %v1760 = vmul.f32 %v792, %v1733
        %v1761 = vmul.f32 %v793, %v1737
        %v1762 = vmul.f32 %v794, %v1733
        %v1763 = vmul.f32 %v795, %v1737
        %v1764 = vmul.f32 %v796, %v1733
        %v1765 = vmul.f32 %v797, %v1737
        %v1766 = vmul.f32 %v798, %v1733
        %v1767 = vmul.f32 %v799, %v1737
        %v1768 = vmul.f32 %v800, %v1733
        %v1769 = vmul.f32 %v801, %v1737
        %v1770 = vmul.f32 %v802, %v1733
        %v1771 = vmul.f32 %v803, %v1737
        %v1772 = vmul.f32 %v804, %v1733
        %v1773 = vmul.f32 %v805, %v1737
        %v1774 = vmul.f32 %v806, %v1733
        %v1775 = vmul.f32 %v807, %v1737
        %v1776 = vmul.f32 %v808, %v1733
        %v1777 = vmul.f32 %v809, %v1737
        %v1778 = vmul.f32 %v810, %v1733
        %v1779 = vmul.f32 %v811, %v1737
        %v1780 = vmul.f32 %v812, %v1733
        %v1781 = vmul.f32 %v813, %v1737
        %v1782 = vmul.f32 %v814, %v1733
        %v1783 = vmul.f32 %v815, %v1737
        %v1784 = vmul.f32 %v816, %v1733
        %v1785 = vmul.f32 %v817, %v1737
        %v1786 = vmul.f32 %v818, %v1733
        %v1787 = vmul.f32 %v819, %v1737
        %v1788 = vmul.f32 %v820, %v1733
        %v1789 = vmul.f32 %v821, %v1737
        %v1790 = vmul.f32 %v822, %v1733
        %v1791 = vmul.f32 %v823, %v1737
        %v1792 = vmul.f32 %v824, %v1733
        %v1793 = vmul.f32 %v825, %v1737
        %v1794 = vmul.f32 %v826, %v1733
        %v1795 = vmul.f32 %v827, %v1737
        %v1796 = vmul.f32 %v828, %v1733
        %v1797 = vmul.f32 %v829, %v1737
        %v1798 = vmul.f32 %v830, %v1733
        %v1799 = vmul.f32 %v831, %v1737
        %v1800 = vmul.f32 %v832, %v1733
        %v1801 = vmul.f32 %v833, %v1737
        %v1802 = vadd.f32 %v1666, %v1738
        %v1803 = vadd.f32 %v1667, %v1739
        %v1804 = vadd.f32 %v1668, %v1740
        %v1805 = vadd.f32 %v1669, %v1741
        %v1806 = vadd.f32 %v1670, %v1742
        %v1807 = vadd.f32 %v1671, %v1743
        %v1808 = vadd.f32 %v1672, %v1744
        %v1809 = vadd.f32 %v1673, %v1745
        %v1810 = vadd.f32 %v1674, %v1746
        %v1811 = vadd.f32 %v1675, %v1747
        %v1812 = vadd.f32 %v1676, %v1748
        %v1813 = vadd.f32 %v1677, %v1749
        %v1814 = vadd.f32 %v1678, %v1750
        %v1815 = vadd.f32 %v1679, %v1751
        %v1816 = vadd.f32 %v1680, %v1752
        %v1817 = vadd.f32 %v1681, %v1753
        %v1818 = vadd.f32 %v1682, %v1754
        %v1819 = vadd.f32 %v1683, %v1755
        %v1820 = vadd.f32 %v1684, %v1756
        %v1821 = vadd.f32 %v1685, %v1757
        %v1822 = vadd.f32 %v1686, %v1758
        %v1823 = vadd.f32 %v1687, %v1759
        %v1824 = vadd.f32 %v1688, %v1760
        %v1825 = vadd.f32 %v1689, %v1761
        %v1826 = vadd.f32 %v1690, %v1762
        %v1827 = vadd.f32 %v1691, %v1763
        %v1828 = vadd.f32 %v1692, %v1764
        %v1829 = vadd.f32 %v1693, %v1765
        %v1830 = vadd.f32 %v1694, %v1766
        %v1831 = vadd.f32 %v1695, %v1767
        %v1832 = vadd.f32 %v1696, %v1768
        %v1833 = vadd.f32 %v1697, %v1769
        %v1834 = vadd.f32 %v1698, %v1770
        %v1835 = vadd.f32 %v1699, %v1771
        %v1836 = vadd.f32 %v1700, %v1772
        %v1837 = vadd.f32 %v1701, %v1773
        %v1838 = vadd.f32 %v1702, %v1774
        %v1839 = vadd.f32 %v1703, %v1775
        %v1840 = vadd.f32 %v1704, %v1776
        %v1841 = vadd.f32 %v1705, %v1777
        %v1842 = vadd.f32 %v1706, %v1778
        %v1843 = vadd.f32 %v1707, %v1779
        %v1844 = vadd.f32 %v1708, %v1780
        %v1845 = vadd.f32 %v1709, %v1781
        %v1846 = vadd.f32 %v1710, %v1782
        %v1847 = vadd.f32 %v1711, %v1783
        %v1848 = vadd.f32 %v1712, %v1784
        %v1849 = vadd.f32 %v1713, %v1785
        %v1850 = vadd.f32 %v1714, %v1786
        %v1851 = vadd.f32 %v1715, %v1787
        %v1852 = vadd.f32 %v1716, %v1788
        %v1853 = vadd.f32 %v1717, %v1789
        %v1854 = vadd.f32 %v1718, %v1790
        %v1855 = vadd.f32 %v1719, %v1791
        %v1856 = vadd.f32 %v1720, %v1792
        %v1857 = vadd.f32 %v1721, %v1793
        %v1858 = vadd.f32 %v1722, %v1794
        %v1859 = vadd.f32 %v1723, %v1795
        %v1860 = vadd.f32 %v1724, %v1796
        %v1861 = vadd.f32 %v1725, %v1797
        %v1862 = vadd.f32 %v1726, %v1798
        %v1863 = vadd.f32 %v1727, %v1799
        %v1864 = vadd.f32 %v1728, %v1800
        %v1865 = vadd.f32 %v1729, %v1801
        %v1866 = vrot.slane %v1114, 7
        %v1867 = vrot.slane %v1115, 7
        %v1868 = vrot.slane %v1116, 7
        %v1869 = vrot.slane %v1117, 7
        %v1870 = vrot.slane %v1118, 7
        %v1871 = vrot.slane %v1119, 7
        %v1872 = vrot.slane %v1120, 7
        %v1873 = vrot.slane %v1121, 7
        %v1874 = vrot.slane %v1122, 7
        %v1875 = vrot.slane %v1123, 7
        %v1876 = vrot.slane %v1124, 7
        %v1877 = vrot.slane %v1125, 7
        %v1878 = vrot.slane %v1126, 7
        %v1879 = vrot.slane %v1127, 7
        %v1880 = vrot.slane %v1128, 7
        %v1881 = vrot.slane %v1129, 7
        %v1882 = vrot.slane %v1130, 7
        %v1883 = vrot.slane %v1131, 7
        %v1884 = vrot.slane %v1132, 7
        %v1885 = vrot.slane %v1133, 7
        %v1886 = vrot.slane %v1134, 7
        %v1887 = vrot.slane %v1135, 7
        %v1888 = vrot.slane %v1136, 7
        %v1889 = vrot.slane %v1137, 7
        %v1890 = vrot.slane %v1138, 7
        %v1891 = vrot.slane %v1139, 7
        %v1892 = vrot.slane %v1140, 7
        %v1893 = vrot.slane %v1141, 7
        %v1894 = vrot.slane %v1142, 7
        %v1895 = vrot.slane %v1143, 7
        %v1896 = vrot.slane %v1144, 7
        %v1897 = vrot.slane %v1145, 7
        %v1898 = vrot.slane %v1146, 7
        %v1899 = vrot.slane %v1147, 7
        %v1900 = vrot.slane %v1148, 7
        %v1901 = vrot.slane %v1149, 7
        %v1902 = vrot.slane %v1150, 7
        %v1903 = vrot.slane %v1151, 7
        %v1904 = vrot.slane %v1152, 7
        %v1905 = vrot.slane %v1153, 7
        %v1906 = vrot.slane %v1154, 7
        %v1907 = vrot.slane %v1155, 7
        %v1908 = vrot.slane %v1156, 7
        %v1909 = vrot.slane %v1157, 7
        %v1910 = vrot.slane %v1158, 7
        %v1911 = vrot.slane %v1159, 7
        %v1912 = vrot.slane %v1160, 7
        %v1913 = vrot.slane %v1161, 7
        %v1914 = vrot.slane %v1162, 7
        %v1915 = vrot.slane %v1163, 7
        %v1916 = vrot.slane %v1164, 7
        %v1917 = vrot.slane %v1165, 7
        %v1918 = vrot.slane %v1166, 7
        %v1919 = vrot.slane %v1167, 7
        %v1920 = vrot.slane %v1168, 7
        %v1921 = vrot.slane %v1169, 7
        %v1922 = vrot.slane %v1170, 7
        %v1923 = vrot.slane %v1171, 7
        %v1924 = vrot.slane %v1172, 7
        %v1925 = vrot.slane %v1173, 7
        %v1926 = vrot.slane %v1174, 7
        %v1927 = vrot.slane %v1175, 7
        %v1928 = vrot.slane %v1176, 7
        %v1929 = vrot.slane %v1177, 7
        %vm1930 = vcmp.lt.s32.totalorder %v322, 1
        %v1931 = vsel %vm1930, %v1926, %v1928
        %v1932 = vsel %vm1930, %v1927, %v1929
        %v1933 = vsel %vm1930, %v1924, %v1926
        %v1934 = vsel %vm1930, %v1925, %v1927
        %v1935 = vsel %vm1930, %v1922, %v1924
        %v1936 = vsel %vm1930, %v1923, %v1925
        %v1937 = vsel %vm1930, %v1920, %v1922
        %v1938 = vsel %vm1930, %v1921, %v1923
        %v1939 = vsel %vm1930, %v1918, %v1920
        %v1940 = vsel %vm1930, %v1919, %v1921
        %v1941 = vsel %vm1930, %v1916, %v1918
        %v1942 = vsel %vm1930, %v1917, %v1919
        %v1943 = vsel %vm1930, %v1914, %v1916
        %v1944 = vsel %vm1930, %v1915, %v1917
        %v1945 = vsel %vm1930, %v1912, %v1914
        %v1946 = vsel %vm1930, %v1913, %v1915
        %v1947 = vsel %vm1930, %v1910, %v1912
        %v1948 = vsel %vm1930, %v1911, %v1913
        %v1949 = vsel %vm1930, %v1908, %v1910
        %v1950 = vsel %vm1930, %v1909, %v1911
        %v1951 = vsel %vm1930, %v1906, %v1908
        %v1952 = vsel %vm1930, %v1907, %v1909
        %v1953 = vsel %vm1930, %v1904, %v1906
        %v1954 = vsel %vm1930, %v1905, %v1907
        %v1955 = vsel %vm1930, %v1902, %v1904
        %v1956 = vsel %vm1930, %v1903, %v1905
        %v1957 = vsel %vm1930, %v1900, %v1902
        %v1958 = vsel %vm1930, %v1901, %v1903
        %v1959 = vsel %vm1930, %v1898, %v1900
        %v1960 = vsel %vm1930, %v1899, %v1901
        %v1961 = vsel %vm1930, %v1896, %v1898
        %v1962 = vsel %vm1930, %v1897, %v1899
        %v1963 = vsel %vm1930, %v1894, %v1896
        %v1964 = vsel %vm1930, %v1895, %v1897
        %v1965 = vsel %vm1930, %v1892, %v1894
        %v1966 = vsel %vm1930, %v1893, %v1895
        %v1967 = vsel %vm1930, %v1890, %v1892
        %v1968 = vsel %vm1930, %v1891, %v1893
        %v1969 = vsel %vm1930, %v1888, %v1890
        %v1970 = vsel %vm1930, %v1889, %v1891
        %v1971 = vsel %vm1930, %v1886, %v1888
        %v1972 = vsel %vm1930, %v1887, %v1889
        %v1973 = vsel %vm1930, %v1884, %v1886
        %v1974 = vsel %vm1930, %v1885, %v1887
        %v1975 = vsel %vm1930, %v1882, %v1884
        %v1976 = vsel %vm1930, %v1883, %v1885
        %v1977 = vsel %vm1930, %v1880, %v1882
        %v1978 = vsel %vm1930, %v1881, %v1883
        %v1979 = vsel %vm1930, %v1878, %v1880
        %v1980 = vsel %vm1930, %v1879, %v1881
        %v1981 = vsel %vm1930, %v1876, %v1878
        %v1982 = vsel %vm1930, %v1877, %v1879
        %v1983 = vsel %vm1930, %v1874, %v1876
        %v1984 = vsel %vm1930, %v1875, %v1877
        %v1985 = vsel %vm1930, %v1872, %v1874
        %v1986 = vsel %vm1930, %v1873, %v1875
        %v1987 = vsel %vm1930, %v1870, %v1872
        %v1988 = vsel %vm1930, %v1871, %v1873
        %v1989 = vsel %vm1930, %v1868, %v1870
        %v1990 = vsel %vm1930, %v1869, %v1871
        %v1991 = vsel %vm1930, %v1866, %v1868
        %v1992 = vsel %vm1930, %v1867, %v1869
        %v1993 = vsel %vm1930, %v1928, %v1866
        %v1994 = vsel %vm1930, %v1929, %v1867
        %v1995 = vsel %vm642, %v1993, 0.0
        %v1996 = vsel %vm642, %v1994, 0.0
        %v1997 = vsel %vm643, %v1991, 0.0
        %v1998 = vsel %vm643, %v1992, 0.0
        %v1999 = vsel %vm644, %v1989, 0.0
        %v2000 = vsel %vm644, %v1990, 0.0
        %v2001 = vsel %vm645, %v1987, 0.0
        %v2002 = vsel %vm645, %v1988, 0.0
        %v2003 = vsel %vm646, %v1985, 0.0
        %v2004 = vsel %vm646, %v1986, 0.0
        %v2005 = vsel %vm647, %v1983, 0.0
        %v2006 = vsel %vm647, %v1984, 0.0
        %v2007 = vsel %vm648, %v1981, 0.0
        %v2008 = vsel %vm648, %v1982, 0.0
        %v2009 = vsel %vm649, %v1979, 0.0
        %v2010 = vsel %vm649, %v1980, 0.0
        %v2011 = vsel %vm650, %v1977, 0.0
        %v2012 = vsel %vm650, %v1978, 0.0
        %v2013 = vsel %vm651, %v1975, 0.0
        %v2014 = vsel %vm651, %v1976, 0.0
        %v2015 = vsel %vm652, %v1973, 0.0
        %v2016 = vsel %vm652, %v1974, 0.0
        %v2017 = vsel %vm653, %v1971, 0.0
        %v2018 = vsel %vm653, %v1972, 0.0
        %v2019 = vsel %vm654, %v1969, 0.0
        %v2020 = vsel %vm654, %v1970, 0.0
        %v2021 = vsel %vm655, %v1967, 0.0
        %v2022 = vsel %vm655, %v1968, 0.0
        %v2023 = vsel %vm656, %v1965, 0.0
        %v2024 = vsel %vm656, %v1966, 0.0
        %v2025 = vsel %vm657, %v1963, 0.0
        %v2026 = vsel %vm657, %v1964, 0.0
        %v2027 = vsel %vm658, %v1961, 0.0
        %v2028 = vsel %vm658, %v1962, 0.0
        %v2029 = vsel %vm659, %v1959, 0.0
        %v2030 = vsel %vm659, %v1960, 0.0
        %v2031 = vsel %vm660, %v1957, 0.0
        %v2032 = vsel %vm660, %v1958, 0.0
        %v2033 = vsel %vm661, %v1955, 0.0
        %v2034 = vsel %vm661, %v1956, 0.0
        %v2035 = vsel %vm662, %v1953, 0.0
        %v2036 = vsel %vm662, %v1954, 0.0
        %v2037 = vsel %vm663, %v1951, 0.0
        %v2038 = vsel %vm663, %v1952, 0.0
        %v2039 = vsel %vm664, %v1949, 0.0
        %v2040 = vsel %vm664, %v1950, 0.0
        %v2041 = vsel %vm665, %v1947, 0.0
        %v2042 = vsel %vm665, %v1948, 0.0
        %v2043 = vsel %vm666, %v1945, 0.0
        %v2044 = vsel %vm666, %v1946, 0.0
        %v2045 = vsel %vm667, %v1943, 0.0
        %v2046 = vsel %vm667, %v1944, 0.0
        %v2047 = vsel %vm668, %v1941, 0.0
        %v2048 = vsel %vm668, %v1942, 0.0
        %v2049 = vsel %vm669, %v1939, 0.0
        %v2050 = vsel %vm669, %v1940, 0.0
        %v2051 = vsel %vm670, %v1937, 0.0
        %v2052 = vsel %vm670, %v1938, 0.0
        %v2053 = vsel %vm671, %v1935, 0.0
        %v2054 = vsel %vm671, %v1936, 0.0
        %v2055 = vsel %vm672, %v1933, 0.0
        %v2056 = vsel %vm672, %v1934, 0.0
        %v2057 = vsel %vm673, %v1931, 0.0
        %v2058 = vsel %vm673, %v1932, 0.0
        %v2059 = vrot.slane %v1802, 1
        %v2060 = vrot.slane %v1803, 1
        %v2061 = vrot.slane %v1804, 1
        %v2062 = vrot.slane %v1805, 1
        %v2063 = vrot.slane %v1806, 1
        %v2064 = vrot.slane %v1807, 1
        %v2065 = vrot.slane %v1808, 1
        %v2066 = vrot.slane %v1809, 1
        %v2067 = vrot.slane %v1810, 1
        %v2068 = vrot.slane %v1811, 1
        %v2069 = vrot.slane %v1812, 1
        %v2070 = vrot.slane %v1813, 1
        %v2071 = vrot.slane %v1814, 1
        %v2072 = vrot.slane %v1815, 1
        %v2073 = vrot.slane %v1816, 1
        %v2074 = vrot.slane %v1817, 1
        %v2075 = vrot.slane %v1818, 1
        %v2076 = vrot.slane %v1819, 1
        %v2077 = vrot.slane %v1820, 1
        %v2078 = vrot.slane %v1821, 1
        %v2079 = vrot.slane %v1822, 1
        %v2080 = vrot.slane %v1823, 1
        %v2081 = vrot.slane %v1824, 1
        %v2082 = vrot.slane %v1825, 1
        %v2083 = vrot.slane %v1826, 1
        %v2084 = vrot.slane %v1827, 1
        %v2085 = vrot.slane %v1828, 1
        %v2086 = vrot.slane %v1829, 1
        %v2087 = vrot.slane %v1830, 1
        %v2088 = vrot.slane %v1831, 1
        %v2089 = vrot.slane %v1832, 1
        %v2090 = vrot.slane %v1833, 1
        %v2091 = vrot.slane %v1834, 1
        %v2092 = vrot.slane %v1835, 1
        %v2093 = vrot.slane %v1836, 1
        %v2094 = vrot.slane %v1837, 1
        %v2095 = vrot.slane %v1838, 1
        %v2096 = vrot.slane %v1839, 1
        %v2097 = vrot.slane %v1840, 1
        %v2098 = vrot.slane %v1841, 1
        %v2099 = vrot.slane %v1842, 1
        %v2100 = vrot.slane %v1843, 1
        %v2101 = vrot.slane %v1844, 1
        %v2102 = vrot.slane %v1845, 1
        %v2103 = vrot.slane %v1846, 1
        %v2104 = vrot.slane %v1847, 1
        %v2105 = vrot.slane %v1848, 1
        %v2106 = vrot.slane %v1849, 1
        %v2107 = vrot.slane %v1850, 1
        %v2108 = vrot.slane %v1851, 1
        %v2109 = vrot.slane %v1852, 1
        %v2110 = vrot.slane %v1853, 1
        %v2111 = vrot.slane %v1854, 1
        %v2112 = vrot.slane %v1855, 1
        %v2113 = vrot.slane %v1856, 1
        %v2114 = vrot.slane %v1857, 1
        %v2115 = vrot.slane %v1858, 1
        %v2116 = vrot.slane %v1859, 1
        %v2117 = vrot.slane %v1860, 1
        %v2118 = vrot.slane %v1861, 1
        %v2119 = vrot.slane %v1862, 1
        %v2120 = vrot.slane %v1863, 1
        %v2121 = vrot.slane %v1864, 1
        %v2122 = vrot.slane %v1865, 1
        %vm2123 = vcmp.lt.s32.totalorder %v322, 7
        %v2124 = vsel %vm2123, %v2119, %v2121
        %v2125 = vsel %vm2123, %v2120, %v2122
        %v2126 = vsel %vm2123, %v2117, %v2119
        %v2127 = vsel %vm2123, %v2118, %v2120
        %v2128 = vsel %vm2123, %v2115, %v2117
        %v2129 = vsel %vm2123, %v2116, %v2118
        %v2130 = vsel %vm2123, %v2113, %v2115
        %v2131 = vsel %vm2123, %v2114, %v2116
        %v2132 = vsel %vm2123, %v2111, %v2113
        %v2133 = vsel %vm2123, %v2112, %v2114
        %v2134 = vsel %vm2123, %v2109, %v2111
        %v2135 = vsel %vm2123, %v2110, %v2112
        %v2136 = vsel %vm2123, %v2107, %v2109
        %v2137 = vsel %vm2123, %v2108, %v2110
        %v2138 = vsel %vm2123, %v2105, %v2107
        %v2139 = vsel %vm2123, %v2106, %v2108
        %v2140 = vsel %vm2123, %v2103, %v2105
        %v2141 = vsel %vm2123, %v2104, %v2106
        %v2142 = vsel %vm2123, %v2101, %v2103
        %v2143 = vsel %vm2123, %v2102, %v2104
        %v2144 = vsel %vm2123, %v2099, %v2101
        %v2145 = vsel %vm2123, %v2100, %v2102
        %v2146 = vsel %vm2123, %v2097, %v2099
        %v2147 = vsel %vm2123, %v2098, %v2100
        %v2148 = vsel %vm2123, %v2095, %v2097
        %v2149 = vsel %vm2123, %v2096, %v2098
        %v2150 = vsel %vm2123, %v2093, %v2095
        %v2151 = vsel %vm2123, %v2094, %v2096
        %v2152 = vsel %vm2123, %v2091, %v2093
        %v2153 = vsel %vm2123, %v2092, %v2094
        %v2154 = vsel %vm2123, %v2089, %v2091
        %v2155 = vsel %vm2123, %v2090, %v2092
        %v2156 = vsel %vm2123, %v2087, %v2089
        %v2157 = vsel %vm2123, %v2088, %v2090
        %v2158 = vsel %vm2123, %v2085, %v2087
        %v2159 = vsel %vm2123, %v2086, %v2088
        %v2160 = vsel %vm2123, %v2083, %v2085
        %v2161 = vsel %vm2123, %v2084, %v2086
        %v2162 = vsel %vm2123, %v2081, %v2083
        %v2163 = vsel %vm2123, %v2082, %v2084
        %v2164 = vsel %vm2123, %v2079, %v2081
        %v2165 = vsel %vm2123, %v2080, %v2082
        %v2166 = vsel %vm2123, %v2077, %v2079
        %v2167 = vsel %vm2123, %v2078, %v2080
        %v2168 = vsel %vm2123, %v2075, %v2077
        %v2169 = vsel %vm2123, %v2076, %v2078
        %v2170 = vsel %vm2123, %v2073, %v2075
        %v2171 = vsel %vm2123, %v2074, %v2076
        %v2172 = vsel %vm2123, %v2071, %v2073
        %v2173 = vsel %vm2123, %v2072, %v2074
        %v2174 = vsel %vm2123, %v2069, %v2071
        %v2175 = vsel %vm2123, %v2070, %v2072
        %v2176 = vsel %vm2123, %v2067, %v2069
        %v2177 = vsel %vm2123, %v2068, %v2070
        %v2178 = vsel %vm2123, %v2065, %v2067
        %v2179 = vsel %vm2123, %v2066, %v2068
        %v2180 = vsel %vm2123, %v2063, %v2065
        %v2181 = vsel %vm2123, %v2064, %v2066
        %v2182 = vsel %vm2123, %v2061, %v2063
        %v2183 = vsel %vm2123, %v2062, %v2064
        %v2184 = vsel %vm2123, %v2059, %v2061
        %v2185 = vsel %vm2123, %v2060, %v2062
        %v2186 = vsel %vm2123, %v2121, %v2059
        %v2187 = vsel %vm2123, %v2122, %v2060
        %v2188 = vsel %vm674, %v2184, 0.0
        %v2189 = vsel %vm674, %v2185, 0.0
        %v2190 = vsel %vm675, %v2182, 0.0
        %v2191 = vsel %vm675, %v2183, 0.0
        %v2192 = vsel %vm676, %v2180, 0.0
        %v2193 = vsel %vm676, %v2181, 0.0
        %v2194 = vsel %vm677, %v2178, 0.0
        %v2195 = vsel %vm677, %v2179, 0.0
        %v2196 = vsel %vm678, %v2176, 0.0
        %v2197 = vsel %vm678, %v2177, 0.0
        %v2198 = vsel %vm679, %v2174, 0.0
        %v2199 = vsel %vm679, %v2175, 0.0
        %v2200 = vsel %vm680, %v2172, 0.0
        %v2201 = vsel %vm680, %v2173, 0.0
        %v2202 = vsel %vm681, %v2170, 0.0
        %v2203 = vsel %vm681, %v2171, 0.0
        %v2204 = vsel %vm682, %v2168, 0.0
        %v2205 = vsel %vm682, %v2169, 0.0
        %v2206 = vsel %vm683, %v2166, 0.0
        %v2207 = vsel %vm683, %v2167, 0.0
        %v2208 = vsel %vm684, %v2164, 0.0
        %v2209 = vsel %vm684, %v2165, 0.0
        %v2210 = vsel %vm685, %v2162, 0.0
        %v2211 = vsel %vm685, %v2163, 0.0
        %v2212 = vsel %vm686, %v2160, 0.0
        %v2213 = vsel %vm686, %v2161, 0.0
        %v2214 = vsel %vm687, %v2158, 0.0
        %v2215 = vsel %vm687, %v2159, 0.0
        %v2216 = vsel %vm688, %v2156, 0.0
        %v2217 = vsel %vm688, %v2157, 0.0
        %v2218 = vsel %vm689, %v2154, 0.0
        %v2219 = vsel %vm689, %v2155, 0.0
        %v2220 = vsel %vm690, %v2152, 0.0
        %v2221 = vsel %vm690, %v2153, 0.0
        %v2222 = vsel %vm691, %v2150, 0.0
        %v2223 = vsel %vm691, %v2151, 0.0
        %v2224 = vsel %vm692, %v2148, 0.0
        %v2225 = vsel %vm692, %v2149, 0.0
        %v2226 = vsel %vm693, %v2146, 0.0
        %v2227 = vsel %vm693, %v2147, 0.0
        %v2228 = vsel %vm694, %v2144, 0.0
        %v2229 = vsel %vm694, %v2145, 0.0
        %v2230 = vsel %vm695, %v2142, 0.0
        %v2231 = vsel %vm695, %v2143, 0.0
        %v2232 = vsel %vm696, %v2140, 0.0
        %v2233 = vsel %vm696, %v2141, 0.0
        %v2234 = vsel %vm697, %v2138, 0.0
        %v2235 = vsel %vm697, %v2139, 0.0
        %v2236 = vsel %vm698, %v2136, 0.0
        %v2237 = vsel %vm698, %v2137, 0.0
        %v2238 = vsel %vm699, %v2134, 0.0
        %v2239 = vsel %vm699, %v2135, 0.0
        %v2240 = vsel %vm700, %v2132, 0.0
        %v2241 = vsel %vm700, %v2133, 0.0
        %v2242 = vsel %vm701, %v2130, 0.0
        %v2243 = vsel %vm701, %v2131, 0.0
        %v2244 = vsel %vm702, %v2128, 0.0
        %v2245 = vsel %vm702, %v2129, 0.0
        %v2246 = vsel %vm703, %v2126, 0.0
        %v2247 = vsel %vm703, %v2127, 0.0
        %v2248 = vsel %vm704, %v2124, 0.0
        %v2249 = vsel %vm704, %v2125, 0.0
        %v2250 = vsel %vm705, %v2186, 0.0
        %v2251 = vsel %vm705, %v2187, 0.0
        %v2252 = vadd.f32 %v1995, %v1458
        %v2253 = vadd.f32 %v1996, %v1459
        %v2254 = vadd.f32 %v1997, %v1460
        %v2255 = vadd.f32 %v1998, %v1461
        %v2256 = vadd.f32 %v1999, %v1462
        %v2257 = vadd.f32 %v2000, %v1463
        %v2258 = vadd.f32 %v2001, %v1464
        %v2259 = vadd.f32 %v2002, %v1465
        %v2260 = vadd.f32 %v2003, %v1466
        %v2261 = vadd.f32 %v2004, %v1467
        %v2262 = vadd.f32 %v2005, %v1468
        %v2263 = vadd.f32 %v2006, %v1469
        %v2264 = vadd.f32 %v2007, %v1470
        %v2265 = vadd.f32 %v2008, %v1471
        %v2266 = vadd.f32 %v2009, %v1472
        %v2267 = vadd.f32 %v2010, %v1473
        %v2268 = vadd.f32 %v2011, %v1474
        %v2269 = vadd.f32 %v2012, %v1475
        %v2270 = vadd.f32 %v2013, %v1476
        %v2271 = vadd.f32 %v2014, %v1477
        %v2272 = vadd.f32 %v2015, %v1478
        %v2273 = vadd.f32 %v2016, %v1479
        %v2274 = vadd.f32 %v2017, %v1480
        %v2275 = vadd.f32 %v2018, %v1481
        %v2276 = vadd.f32 %v2019, %v1482
        %v2277 = vadd.f32 %v2020, %v1483
        %v2278 = vadd.f32 %v2021, %v1484
        %v2279 = vadd.f32 %v2022, %v1485
        %v2280 = vadd.f32 %v2023, %v1486
        %v2281 = vadd.f32 %v2024, %v1487
        %v2282 = vadd.f32 %v2025, %v1488
        %v2283 = vadd.f32 %v2026, %v1489
        %v2284 = vadd.f32 %v2027, %v1490
        %v2285 = vadd.f32 %v2028, %v1491
        %v2286 = vadd.f32 %v2029, %v1492
        %v2287 = vadd.f32 %v2030, %v1493
        %v2288 = vadd.f32 %v2031, %v1494
        %v2289 = vadd.f32 %v2032, %v1495
        %v2290 = vadd.f32 %v2033, %v1496
        %v2291 = vadd.f32 %v2034, %v1497
        %v2292 = vadd.f32 %v2035, %v1498
        %v2293 = vadd.f32 %v2036, %v1499
        %v2294 = vadd.f32 %v2037, %v1500
        %v2295 = vadd.f32 %v2038, %v1501
        %v2296 = vadd.f32 %v2039, %v1502
        %v2297 = vadd.f32 %v2040, %v1503
        %v2298 = vadd.f32 %v2041, %v1504
        %v2299 = vadd.f32 %v2042, %v1505
        %v2300 = vadd.f32 %v2043, %v1506
        %v2301 = vadd.f32 %v2044, %v1507
        %v2302 = vadd.f32 %v2045, %v1508
        %v2303 = vadd.f32 %v2046, %v1509
        %v2304 = vadd.f32 %v2047, %v1510
        %v2305 = vadd.f32 %v2048, %v1511
        %v2306 = vadd.f32 %v2049, %v1512
        %v2307 = vadd.f32 %v2050, %v1513
        %v2308 = vadd.f32 %v2051, %v1514
        %v2309 = vadd.f32 %v2052, %v1515
        %v2310 = vadd.f32 %v2053, %v1516
        %v2311 = vadd.f32 %v2054, %v1517
        %v2312 = vadd.f32 %v2055, %v1518
        %v2313 = vadd.f32 %v2056, %v1519
        %v2314 = vadd.f32 %v2057, %v1520
        %v2315 = vadd.f32 %v2058, %v1521
        %v2316 = vadd.f32 %v2252, %v2188
        %v2317 = vadd.f32 %v2253, %v2189
        %v2318 = vadd.f32 %v2254, %v2190
        %v2319 = vadd.f32 %v2255, %v2191
        %v2320 = vadd.f32 %v2256, %v2192
        %v2321 = vadd.f32 %v2257, %v2193
        %v2322 = vadd.f32 %v2258, %v2194
        %v2323 = vadd.f32 %v2259, %v2195
        %v2324 = vadd.f32 %v2260, %v2196
        %v2325 = vadd.f32 %v2261, %v2197
        %v2326 = vadd.f32 %v2262, %v2198
        %v2327 = vadd.f32 %v2263, %v2199
        %v2328 = vadd.f32 %v2264, %v2200
        %v2329 = vadd.f32 %v2265, %v2201
        %v2330 = vadd.f32 %v2266, %v2202
        %v2331 = vadd.f32 %v2267, %v2203
        %v2332 = vadd.f32 %v2268, %v2204
        %v2333 = vadd.f32 %v2269, %v2205
        %v2334 = vadd.f32 %v2270, %v2206
        %v2335 = vadd.f32 %v2271, %v2207
        %v2336 = vadd.f32 %v2272, %v2208
        %v2337 = vadd.f32 %v2273, %v2209
        %v2338 = vadd.f32 %v2274, %v2210
        %v2339 = vadd.f32 %v2275, %v2211
        %v2340 = vadd.f32 %v2276, %v2212
        %v2341 = vadd.f32 %v2277, %v2213
        %v2342 = vadd.f32 %v2278, %v2214
        %v2343 = vadd.f32 %v2279, %v2215
        %v2344 = vadd.f32 %v2280, %v2216
        %v2345 = vadd.f32 %v2281, %v2217
        %v2346 = vadd.f32 %v2282, %v2218
        %v2347 = vadd.f32 %v2283, %v2219
        %v2348 = vadd.f32 %v2284, %v2220
        %v2349 = vadd.f32 %v2285, %v2221
        %v2350 = vadd.f32 %v2286, %v2222
        %v2351 = vadd.f32 %v2287, %v2223
        %v2352 = vadd.f32 %v2288, %v2224
        %v2353 = vadd.f32 %v2289, %v2225
        %v2354 = vadd.f32 %v2290, %v2226
        %v2355 = vadd.f32 %v2291, %v2227
        %v2356 = vadd.f32 %v2292, %v2228
        %v2357 = vadd.f32 %v2293, %v2229
        %v2358 = vadd.f32 %v2294, %v2230
        %v2359 = vadd.f32 %v2295, %v2231
        %v2360 = vadd.f32 %v2296, %v2232
        %v2361 = vadd.f32 %v2297, %v2233
        %v2362 = vadd.f32 %v2298, %v2234
        %v2363 = vadd.f32 %v2299, %v2235
        %v2364 = vadd.f32 %v2300, %v2236
        %v2365 = vadd.f32 %v2301, %v2237
        %v2366 = vadd.f32 %v2302, %v2238
        %v2367 = vadd.f32 %v2303, %v2239
        %v2368 = vadd.f32 %v2304, %v2240
        %v2369 = vadd.f32 %v2305, %v2241
        %v2370 = vadd.f32 %v2306, %v2242
        %v2371 = vadd.f32 %v2307, %v2243
        %v2372 = vadd.f32 %v2308, %v2244
        %v2373 = vadd.f32 %v2309, %v2245
        %v2374 = vadd.f32 %v2310, %v2246
        %v2375 = vadd.f32 %v2311, %v2247
        %v2376 = vadd.f32 %v2312, %v2248
        %v2377 = vadd.f32 %v2313, %v2249
        %v2378 = vadd.f32 %v2314, %v2250
        %v2379 = vadd.f32 %v2315, %v2251
        %v2381 = vlaneseq
        %v2382 = vshrl.u32 %v2381, 7
        %v2383 = vsub.s32 0, %v2382
        %v2384 = vrot.slane %v320, %v2383
        %v2385 = vlaneseq
        %v2386 = vshrl.u32 %v2385, 7
        %v2387 = vsub.s32 1, %v2386
        %v2388 = vrot.slane %v320, %v2387
        %v2391 = vadd.f32 %v2316, %v2384
        %v2392 = vadd.f32 %v2317, %v2388
        %v2393 = vadd.f32 %v2318, %v2384
        %v2394 = vadd.f32 %v2319, %v2388
        %v2395 = vadd.f32 %v2320, %v2384
        %v2396 = vadd.f32 %v2321, %v2388
        %v2397 = vadd.f32 %v2322, %v2384
        %v2398 = vadd.f32 %v2323, %v2388
        %v2399 = vadd.f32 %v2324, %v2384
        %v2400 = vadd.f32 %v2325, %v2388
        %v2401 = vadd.f32 %v2326, %v2384
        %v2402 = vadd.f32 %v2327, %v2388
        %v2403 = vadd.f32 %v2328, %v2384
        %v2404 = vadd.f32 %v2329, %v2388
        %v2405 = vadd.f32 %v2330, %v2384
        %v2406 = vadd.f32 %v2331, %v2388
        %v2407 = vadd.f32 %v2332, %v2384
        %v2408 = vadd.f32 %v2333, %v2388
        %v2409 = vadd.f32 %v2334, %v2384
        %v2410 = vadd.f32 %v2335, %v2388
        %v2411 = vadd.f32 %v2336, %v2384
        %v2412 = vadd.f32 %v2337, %v2388
        %v2413 = vadd.f32 %v2338, %v2384
        %v2414 = vadd.f32 %v2339, %v2388
        %v2415 = vadd.f32 %v2340, %v2384
        %v2416 = vadd.f32 %v2341, %v2388
        %v2417 = vadd.f32 %v2342, %v2384
        %v2418 = vadd.f32 %v2343, %v2388
        %v2419 = vadd.f32 %v2344, %v2384
        %v2420 = vadd.f32 %v2345, %v2388
        %v2421 = vadd.f32 %v2346, %v2384
        %v2422 = vadd.f32 %v2347, %v2388
        %v2423 = vadd.f32 %v2348, %v2384
        %v2424 = vadd.f32 %v2349, %v2388
        %v2425 = vadd.f32 %v2350, %v2384
        %v2426 = vadd.f32 %v2351, %v2388
        %v2427 = vadd.f32 %v2352, %v2384
        %v2428 = vadd.f32 %v2353, %v2388
        %v2429 = vadd.f32 %v2354, %v2384
        %v2430 = vadd.f32 %v2355, %v2388
        %v2431 = vadd.f32 %v2356, %v2384
        %v2432 = vadd.f32 %v2357, %v2388
        %v2433 = vadd.f32 %v2358, %v2384
        %v2434 = vadd.f32 %v2359, %v2388
        %v2435 = vadd.f32 %v2360, %v2384
        %v2436 = vadd.f32 %v2361, %v2388
        %v2437 = vadd.f32 %v2362, %v2384
        %v2438 = vadd.f32 %v2363, %v2388
        %v2439 = vadd.f32 %v2364, %v2384
        %v2440 = vadd.f32 %v2365, %v2388
        %v2441 = vadd.f32 %v2366, %v2384
        %v2442 = vadd.f32 %v2367, %v2388
        %v2443 = vadd.f32 %v2368, %v2384
        %v2444 = vadd.f32 %v2369, %v2388
        %v2445 = vadd.f32 %v2370, %v2384
        %v2446 = vadd.f32 %v2371, %v2388
        %v2447 = vadd.f32 %v2372, %v2384
        %v2448 = vadd.f32 %v2373, %v2388
        %v2449 = vadd.f32 %v2374, %v2384
        %v2450 = vadd.f32 %v2375, %v2388
        %v2451 = vadd.f32 %v2376, %v2384
        %v2452 = vadd.f32 %v2377, %v2388
        %v2453 = vadd.f32 %v2378, %v2384
        %v2454 = vadd.f32 %v2379, %v2388
        %2455 = vst [vmem:[%s243] sm:$0xff] %v2391
        %2456 = vst [vmem:[%s243 + $0x8] sm:$0xff] %v2392
        %2457 = vst [vmem:[%s243 + $0x10] sm:$0xff] %v2393
        %2458 = vst [vmem:[%s243 + $0x18] sm:$0xff] %v2394
        %2459 = vst [vmem:[%s243 + $0x20] sm:$0xff] %v2395
        %2460 = vst [vmem:[%s243 + $0x28] sm:$0xff] %v2396
        %2461 = vst [vmem:[%s243 + $0x30] sm:$0xff] %v2397
        %2462 = vst [vmem:[%s243 + $0x38] sm:$0xff] %v2398
        %2463 = vst [vmem:[%s243 + $0x40] sm:$0xff] %v2399
        %2464 = vst [vmem:[%s243 + $0x48] sm:$0xff] %v2400
        %2465 = vst [vmem:[%s243 + $0x50] sm:$0xff] %v2401
        %2466 = vst [vmem:[%s243 + $0x58] sm:$0xff] %v2402
        %2467 = vst [vmem:[%s243 + $0x60] sm:$0xff] %v2403
        %2468 = vst [vmem:[%s243 + $0x68] sm:$0xff] %v2404
        %2469 = vst [vmem:[%s243 + $0x70] sm:$0xff] %v2405
        %2470 = vst [vmem:[%s243 + $0x78] sm:$0xff] %v2406
        %2471 = vst [vmem:[%s243 + $0x80] sm:$0xff] %v2407
        %2472 = vst [vmem:[%s243 + $0x88] sm:$0xff] %v2408
        %2473 = vst [vmem:[%s243 + $0x90] sm:$0xff] %v2409
        %2474 = vst [vmem:[%s243 + $0x98] sm:$0xff] %v2410
        %2475 = vst [vmem:[%s243 + $0xa0] sm:$0xff] %v2411
        %2476 = vst [vmem:[%s243 + $0xa8] sm:$0xff] %v2412
        %2477 = vst [vmem:[%s243 + $0xb0] sm:$0xff] %v2413
        %2478 = vst [vmem:[%s243 + $0xb8] sm:$0xff] %v2414
        %2479 = vst [vmem:[%s243 + $0xc0] sm:$0xff] %v2415
        %2480 = vst [vmem:[%s243 + $0xc8] sm:$0xff] %v2416
        %2481 = vst [vmem:[%s243 + $0xd0] sm:$0xff] %v2417
        %2482 = vst [vmem:[%s243 + $0xd8] sm:$0xff] %v2418
        %2483 = vst [vmem:[%s243 + $0xe0] sm:$0xff] %v2419
        %2484 = vst [vmem:[%s243 + $0xe8] sm:$0xff] %v2420
        %2485 = vst [vmem:[%s243 + $0xf0] sm:$0xff] %v2421
        %2486 = vst [vmem:[%s243 + $0xf8] sm:$0xff] %v2422
        %2487 = vst [vmem:[%s243 + $0x100] sm:$0xff] %v2423
        %2488 = vst [vmem:[%s243 + $0x108] sm:$0xff] %v2424
        %2489 = vst [vmem:[%s243 + $0x110] sm:$0xff] %v2425
        %2490 = vst [vmem:[%s243 + $0x118] sm:$0xff] %v2426
        %2491 = vst [vmem:[%s243 + $0x120] sm:$0xff] %v2427
        %2492 = vst [vmem:[%s243 + $0x128] sm:$0xff] %v2428
        %2493 = vst [vmem:[%s243 + $0x130] sm:$0xff] %v2429
        %2494 = vst [vmem:[%s243 + $0x138] sm:$0xff] %v2430
        %2495 = vst [vmem:[%s243 + $0x140] sm:$0xff] %v2431
        %2496 = vst [vmem:[%s243 + $0x148] sm:$0xff] %v2432
        %2497 = vst [vmem:[%s243 + $0x150] sm:$0xff] %v2433
        %2498 = vst [vmem:[%s243 + $0x158] sm:$0xff] %v2434
        %2499 = vst [vmem:[%s243 + $0x160] sm:$0xff] %v2435
        %2500 = vst [vmem:[%s243 + $0x168] sm:$0xff] %v2436
        %2501 = vst [vmem:[%s243 + $0x170] sm:$0xff] %v2437
        %2502 = vst [vmem:[%s243 + $0x178] sm:$0xff] %v2438
        %2503 = vst [vmem:[%s243 + $0x180] sm:$0xff] %v2439
        %2504 = vst [vmem:[%s243 + $0x188] sm:$0xff] %v2440
        %2505 = vst [vmem:[%s243 + $0x190] sm:$0xff] %v2441
        %2506 = vst [vmem:[%s243 + $0x198] sm:$0xff] %v2442
        %2507 = vst [vmem:[%s243 + $0x1a0] sm:$0xff] %v2443
        %2508 = vst [vmem:[%s243 + $0x1a8] sm:$0xff] %v2444
        %2509 = vst [vmem:[%s243 + $0x1b0] sm:$0xff] %v2445
        %2510 = vst [vmem:[%s243 + $0x1b8] sm:$0xff] %v2446
        %2511 = vst [vmem:[%s243 + $0x1c0] sm:$0xff] %v2447
        %2512 = vst [vmem:[%s243 + $0x1c8] sm:$0xff] %v2448
        %2513 = vst [vmem:[%s243 + $0x1d0] sm:$0xff] %v2449
        %2514 = vst [vmem:[%s243 + $0x1d8] sm:$0xff] %v2450
        %2515 = vst [vmem:[%s243 + $0x1e0] sm:$0xff] %v2451
        %2516 = vst [vmem:[%s243 + $0x1e8] sm:$0xff] %v2452
        %2517 = vst [vmem:[%s243 + $0x1f0] sm:$0xff] %v2453
        %2518 = vst [vmem:[%s243 + $0x1f8] sm:$0xff] %v2454
        %s2519 = sand.u32 %s123, 1
        %s2520 = scalar_lea.sflag [#allocation4], %s2519
        %s2521 = sand.u32 %s123, 1
        %s2522 = smul.addr %s2521, 512
        %s2523 = scalar_lea.vmem [#allocation7], %s2522
        // Predicated region
        $region41: #{tpu_custom_call.1} parent=31 // pred_check
          %p2524 = pneg %p133
        $region42: #{tpu_custom_call.1} parent=31 // pred_check_branch
          %2526 = sbr.rel (%p2524) target = $region44
        $region43: #{tpu_custom_call.1} parent=31 // pred_region
          %s2527 = smul.u32 2, %s26
          %s2529 = ssub.s32 8192, 8192
          %2530 = vsyncadd %s2520, %s2529
          %s2531 = smul.addr %s25, 64
          %s2532 = sadd.s32 %s2527, %s2531
          %s2533 = smul.addr %s2532, 128
          %s2534 = scalar_lea.hbm %s3, %s2533
          %s2535 = sshll.u32 %s2523, 4
          %s2536 = int_to_ptr.vmem [resolvable:$true] %s2535
          %2541 = dma.vmem_to_hbm [thread:$0]  %s2536, 8192, %s2534, %s2520, 256, 256, 16
        $region44: #{tpu_custom_call.1} parent=31 // pred_fallthru
          _
      $region32: #{tpu_custom_call.1} parent=5 // pred_fallthru
        _
      %p2542 = scmp.le.s32.totalorder 2, %s16
      // Predicated region
      $region45: #{tpu_custom_call.1} parent=5 // pred_check
        %p2543 = pneg %p2542
      $region46: #{tpu_custom_call.1} parent=5 // pred_check_branch
        %2545 = sbr.rel (%p2543) target = $region48
      $region47: #{tpu_custom_call.1} parent=5 // pred_region
        %s2546 = ssub.s32 %s16, 2
        // Predicated region
        $region49: #{tpu_custom_call.1} parent=47 // pred_check
          %p2547 = pneg %p139
        $region50: #{tpu_custom_call.1} parent=47 // pred_check_branch
          %2549 = sbr.rel (%p2547) target = $region52
        $region51: #{tpu_custom_call.1} parent=47 // pred_region
          %s2550 = sand.u32 %s124, 1
          %s2551 = scalar_lea.sflag [#allocation4], %s2550
          %s2552 = sand.u32 %s124, 1
          %s2553 = smul.addr %s2552, 512
          %s2554 = scalar_lea.vmem [#allocation7], %s2553
          %2555 = dma.done %s2551, 8192
        $region52: #{tpu_custom_call.1} parent=47 // pred_fallthru
          _
      $region48: #{tpu_custom_call.1} parent=5 // pred_fallthru
        _
    $region6: #{tpu_custom_call.1} parent=1 // loop_footer
      %s20 = sadd.s32 1, %s16
    $region7: #{tpu_custom_call.1} parent=1 // loop_footer_branch
      %15 = sbr.rel target = $region3
    $region8: #{tpu_custom_call.1} parent=1 // loop_exit
      _
    %2556 = vsyncpa [#allocation3], 1
    %s2557 = scalar_lea.sflag [#allocation3], 1
    %2558 = vsyncpa %s2557, 1
    %2559 = vsyncpa [#allocation6], 1
    %2560 = vsyncpa [#allocation4], 1
    %s2561 = scalar_lea.sflag [#allocation4], 1
    %2562 = vsyncpa %s2561, 1

</llo_original>
